<compile_context>
chip_gen: v7x
topology: tpu7x:2x2x1
jax: 0.10.0
libtpu: 0.0.40
codegen_flags: <defaults>
</compile_context>

<pallas_src>
import functools
import numpy as np

import jax
import jax.numpy as jnp
from jax.experimental import pallas as pl
from jax.experimental.pallas import tpu as pltpu

# ----------------------------- configuration --------------------------------
# real_shape_view = (CIN, H, W); two valid 3x3 convs -> 32 * (H-4) * (W-4) = 192
CIN, H, W = 4, 7, 6
H1, W1 = H - 2, W - 2          # conv1 output spatial:  5 x 4
H2, W2 = H1 - 2, W1 - 2        # conv2 output spatial:  3 x 2
P1, P2 = H1 * W1, H2 * W2      # 20, 6   (32 * 6 = 192)
C1, C2 = 32, 32                # conv channel widths
K1 = CIN * 9                   # conv1 patch size = 36

INPUT_SHAPE_VIEW = CIN * H * W                 # 168
FEAT = 6                                       # input_shape_feature
ID_DIM, ACT_DIM = 3, 5
IDACT = ID_DIM + ACT_DIM                       # neighbor_actions_view = 8
FEAT_TOT = FEAT + IDACT                        # 14
FEAT_PAD = 16                                  # zero-padded feat width
HID0, HID1 = 32, 32                            # args.mlp_hidden_dim
NACT = 5                                       # args.n_actions
B = 8                                          # batch (rows of obs)
OBS_DIM = INPUT_SHAPE_VIEW + FEAT_TOT          # 182

# small-weight slab row offsets (all multiples of 16 -> bf16 sublane aligned)
W2_OFF = 0                                     # [288, 32]
WF1_OFF = 288                                  # [192, 32] (6 x [32,32] blocks)
WF2A_OFF = 480                                 # [32, 32]
WF2B_OFF = 512                                 # [16, 32]  (rows >= 14 zero)
WF3_OFF = 528                                  # [32, 32]  (cols >= NACT zero)
WSLAB_ROWS = 560


# ------------------------------- glue helpers -------------------------------
@functools.lru_cache(maxsize=None)
def _gather_indices(batch):
    """Flat-obs indices for the conv2-ordered conv1 im2col.

    Output row r = p*batch + b  with p = conv2 output position (i2, j2) and
    b = batch; column q = k*36 + m with k = conv2 tap (kh, kw) and
    m = c*9 + r3*3 + s3 the conv1 filter element.
    Value = obs[b, c*H*W + (i2+kh+r3)*W + (j2+kw+s3)].
    """
    k = np.arange(9)
    kh, kw = k // 3, k % 3
    p = np.arange(P2)
    i2, j2 = p // W2, p % W2
    b = np.arange(batch)
    m = np.arange(K1)
    c, r3, s3 = m // 9, (m % 9) // 3, m % 3

    y = i2[:, None, None, None] + kh[None, None, :, None] + r3[None, None, None, :]
    x = j2[:, None, None, None] + kw[None, None, :, None] + s3[None, None, None, :]
    src = c[None, None, None, :] * (H * W) + y * W + x          # [P2, 1, 9, 36]
    idx = b[None, :, None, None] * OBS_DIM + src                # [P2, batch, 9, 36]
    return idx.reshape(P2 * batch, 9 * K1).astype(np.int32)


def pack_params(params):
    """One-time repack of PyTorch-layout weights (call at init, not per step).

    Returns:
      w1blk : bf16 [324, 288]  block-diagonal conv1 weight (+ tap-major cols)
      wslab : bf16 [560, 32]   conv2 / fc1 / fc2a / fc2b / fc3 stacked
      bslab : f32  [8, 288]    row 0 = b1 tiled x9; rows 1..4 = b2,bf1,bf2,bf3
    """
    w1p = params["W1"].reshape(C1, K1).T                                       # [36, 32]
    w1blk = jnp.kron(jnp.eye(9, dtype=jnp.float32), w1p)                       # [324, 288]

    w2p = jnp.transpose(params["W2"], (2, 3, 1, 0)).reshape(9 * C1, C2)        # [288, 32]
    wf1p = jnp.transpose(params["Wf1"].reshape(HID0, C2, P2),
                         (2, 1, 0)).reshape(P2 * C2, HID0)                     # [192, 32]
    wf2a = params["Wf2"][:, :HID0].T                                           # [32, 32]
    wf2b = params["Wf2"][:, HID0:].T                                           # [14, 32]
    wf3p = params["Wf3"].T                                                     # [32, 5]

    wslab = jnp.zeros((WSLAB_ROWS, 32), jnp.float32)
    wslab = wslab.at[W2_OFF:W2_OFF + 9 * C1].set(w2p)
    wslab = wslab.at[WF1_OFF:WF1_OFF + P2 * C2].set(wf1p)
    wslab = wslab.at[WF2A_OFF:WF2A_OFF + HID0].set(wf2a)
    wslab = wslab.at[WF2B_OFF:WF2B_OFF + FEAT_TOT].set(wf2b)
    wslab = wslab.at[WF3_OFF:WF3_OFF + HID1, :NACT].set(wf3p)

    bslab = jnp.zeros((8, 9 * C1), jnp.float32)
    bslab = bslab.at[0, :].set(jnp.tile(params["b1"], 9))
    bslab = bslab.at[1, :C2].set(params["b2"])
    bslab = bslab.at[2, :HID0].set(params["bf1"])
    bslab = bslab.at[3, :HID1].set(params["bf2"])
    bslab = bslab.at[4, :NACT].set(params["bf3"])
    return w1blk.astype(jnp.bfloat16), wslab.astype(jnp.bfloat16), bslab


# --------------------------------- kernel -----------------------------------
def make_kernel(batch):
    f32, bf16 = jnp.float32, jnp.bfloat16

    def kernel(xbig_ref, feat_ref, w1_ref, w_ref, b_ref, q_ref):
        # ---- conv1 + ReLU: block-diagonal weight -> result is already in the
        #      conv2 lane-packed layout (rows = (p, b), lanes = (tap, c1)). ----
        y1 = jnp.dot(xbig_ref[...], w1_ref[...], preferred_element_type=f32)
        y1 = jnp.maximum(y1 + b_ref[0:1, :], 0.0)               # [P2*B, 288] f32

        # ---- conv2 + ReLU: single K=288 matmul ----
        w2 = w_ref[W2_OFF:W2_OFF + 9 * C1, :]
        y2 = jnp.dot(y1.astype(bf16), w2, preferred_element_type=f32)
        y2 = jnp.maximum(y2 + b_ref[1:2, :C2], 0.0)             # [P2*B, C2], rows=(p,b)

        # ---- fc1 + ReLU: NCHW flatten as accumulation over P2 blocks ----
        acc = jnp.zeros((batch, HID0), f32)
        for p in range(P2):
            wf1_p = w_ref[WF1_OFF + p * C2:WF1_OFF + (p + 1) * C2, :]
            blk = y2[p * batch:(p + 1) * batch, :].astype(bf16)  # 8-row aligned f32 slice
            acc = acc + jnp.dot(blk, wf1_p, preferred_element_type=f32)
        x1 = jnp.maximum(acc + b_ref[2:3, :HID0], 0.0)          # [B, HID0]

        # ---- fc2 + ReLU: torch.cat folded into two dots (no concat scratch) ----
        wf2a = w_ref[WF2A_OFF:WF2A_OFF + HID0, :]
        wf2b = w_ref[WF2B_OFF:WF2B_OFF + FEAT_PAD, :]
        h = (jnp.dot(x1.astype(bf16), wf2a, preferred_element_type=f32)
             + jnp.dot(feat_ref[...], wf2b, preferred_element_type=f32))
        h = jnp.maximum(h + b_ref[3:4, :HID1], 0.0)             # [B, HID1]

        # ---- fc3: full 32-wide result (cols >= NACT are zero); slice outside ----
        wf3 = w_ref[WF3_OFF:WF3_OFF + HID1, :]
        q_ref[...] = (jnp.dot(h.astype(bf16), wf3, preferred_element_type=f32)
                      + b_ref[4:5, :32])

    return kernel


# -------------------------------- wrapper -----------------------------------
@jax.jit
def convnet_mlp_forward(obs, w1blk, wslab, bslab):
    batch = obs.shape[0]

    # im2col for conv1 in conv2-tap-major column order (one XLA gather).
    flat_idx = _gather_indices(batch)                         # numpy [P2*B, 324]
    xbig = obs.reshape(-1)[flat_idx].astype(jnp.bfloat16)     # [48, 324] bf16

    # feat (+ neighbor id/act), zero-padded to 16 lanes, bf16 for the MXU.
    feat = obs[:, INPUT_SHAPE_VIEW:]                          # [B, 14]
    featp = jnp.zeros((batch, FEAT_PAD), jnp.float32)
    featp = featp.at[:, :FEAT_TOT].set(feat).astype(jnp.bfloat16)

    vmem = pltpu.MemorySpace.VMEM
    q32 = pl.pallas_call(
        make_kernel(batch),
        out_shape=jax.ShapeDtypeStruct((batch, 32), jnp.float32),
        in_specs=[pl.BlockSpec(memory_space=vmem)] * 5,
        out_specs=pl.BlockSpec(memory_space=vmem),
    )(xbig, featp, w1blk, wslab, bslab)
    return q32[:, :NACT]


# --------------------------- params & pure-JAX ref ---------------------------
def init_params(key):
    ks = jax.random.split(key, 10)
    s = 0.1
    return dict(
        W1=s * jax.random.normal(ks[0], (C1, CIN, 3, 3), jnp.float32),
        b1=s * jax.random.normal(ks[1], (C1,), jnp.float32),
        W2=s * jax.random.normal(ks[2], (C2, C1, 3, 3), jnp.float32),
        b2=s * jax.random.normal(ks[3], (C2,), jnp.float32),
        Wf1=s * jax.random.normal(ks[4], (HID0, 192), jnp.float32),
        bf1=s * jax.random.normal(ks[5], (HID0,), jnp.float32),
        Wf2=s * jax.random.normal(ks[6], (HID1, HID0 + FEAT_TOT), jnp.float32),
        bf2=s * jax.random.normal(ks[7], (HID1,), jnp.float32),
        Wf3=s * jax.random.normal(ks[8], (NACT, HID1), jnp.float32),
        bf3=s * jax.random.normal(ks[9], (NACT,), jnp.float32),
    )


def reference_forward(obs, params):
    """Pure-JAX (f32) mirror of the PyTorch forward (NCHW convs)."""
    dn = ("NCHW", "OIHW", "NCHW")
    view = obs[:, :INPUT_SHAPE_VIEW].reshape(-1, CIN, H, W)
    feat = obs[:, INPUT_SHAPE_VIEW:]
    out = jax.lax.conv_general_dilated(view, params["W1"], (1, 1), "VALID",
                                       dimension_numbers=dn)
    out = jnp.maximum(out + params["b1"][None, :, None, None], 0.0)
    out = jax.lax.conv_general_dilated(out, params["W2"], (1, 1), "VALID",
                                       dimension_numbers=dn)
    out = jnp.maximum(out + params["b2"][None, :, None, None], 0.0)
    flat = out.reshape(-1, 192)
    x = jnp.maximum(flat @ params["Wf1"].T + params["bf1"], 0.0)
    hcat = jnp.concatenate([x, feat], axis=1)
    h = jnp.maximum(hcat @ params["Wf2"].T + params["bf2"], 0.0)
    return h @ params["Wf3"].T + params["bf3"]


# ----------------------------------- main ------------------------------------
if __name__ == "__main__":
    key = jax.random.PRNGKey(0)
    k_obs, k_par = jax.random.split(key)
    obs = jax.random.normal(k_obs, (B, OBS_DIM), jnp.float32)
    params = init_params(k_par)

    # One-time weight repack (hoisted out of the per-call forward).
    w1blk, wslab, bslab = pack_params(params)
    w1blk, wslab, bslab = jax.block_until_ready((w1blk, wslab, bslab))

    q = convnet_mlp_forward(obs, w1blk, wslab, bslab)
    q = jax.block_until_ready(q)

    q_ref = reference_forward(obs, params)
    assert q.shape == (B, NACT), q.shape
    # bf16 MXU operands (f32 accumulation) -> loosened tolerance vs f32 reference.
    # This is an intentional precision tradeoff (confirmed acceptable here).
    if not jnp.allclose(q, q_ref, atol=3e-2, rtol=3e-2):
        maxdiff = float(jnp.max(jnp.abs(q - q_ref)))
        raise AssertionError(f"Pallas kernel output mismatch, max|diff|={maxdiff}")

    print("KERNEL_OK")
</pallas_src>

<mosaic_0001>
module attributes {stable_mosaic.version = 11 : i64} {
  func.func @kernel(%arg0: memref<48x324xbf16, #tpu.memory_space<vmem>>, %arg1: memref<8x16xbf16, #tpu.memory_space<vmem>>, %arg2: memref<324x288xbf16, #tpu.memory_space<vmem>>, %arg3: memref<560x32xbf16, #tpu.memory_space<vmem>>, %arg4: memref<8x288xf32, #tpu.memory_space<vmem>>, %arg5: memref<8x32xf32, #tpu.memory_space<vmem>>) attributes {dimension_semantics = [], scalar_prefetch = 0 : i64, scratch_operands = 0 : i64, tpu.core_type = #tpu.core_type<tc>} {
    %c0 = arith.constant 0 : index
    %c0_0 = arith.constant 0 : index
    %0 = vector.load %arg0[%c0, %c0_0] : memref<48x324xbf16, #tpu.memory_space<vmem>>, vector<48x324xbf16>
    %c0_1 = arith.constant 0 : index
    %c0_2 = arith.constant 0 : index
    %1 = vector.load %arg2[%c0_1, %c0_2] : memref<324x288xbf16, #tpu.memory_space<vmem>>, vector<324x288xbf16>
    %cst = arith.constant dense<0.000000e+00> : vector<48x288xf32>
    %2 = tpu.matmul %0, %1, %cst {dimension_numbers = #tpu.dot_dimension_numbers<[1], [0], [0], [1], [0, 0, 1, 1], [], []>} : vector<48x324xbf16>, vector<324x288xbf16>, vector<48x288xf32> -> vector<48x288xf32>
    %c0_3 = arith.constant 0 : index
    %c0_4 = arith.constant 0 : index
    %3 = vector.load %arg4[%c0_3, %c0_4] : memref<8x288xf32, #tpu.memory_space<vmem>>, vector<1x288xf32>
    %4 = vector.broadcast %3 : vector<1x288xf32> to vector<48x288xf32>
    %5 = arith.addf %2, %4 : vector<48x288xf32>
    %cst_5 = arith.constant 0.000000e+00 : f32
    %6 = vector.broadcast %cst_5 : f32 to vector<48x288xf32>
    %7 = arith.maximumf %5, %6 : vector<48x288xf32>
    %c0_6 = arith.constant 0 : index
    %c0_7 = arith.constant 0 : index
    %8 = vector.load %arg3[%c0_6, %c0_7] : memref<560x32xbf16, #tpu.memory_space<vmem>>, vector<288x32xbf16>
    %9 = arith.truncf %7 : vector<48x288xf32> to vector<48x288xbf16>
    %cst_8 = arith.constant dense<0.000000e+00> : vector<48x32xf32>
    %10 = tpu.matmul %9, %8, %cst_8 {dimension_numbers = #tpu.dot_dimension_numbers<[1], [0], [0], [1], [0, 0, 1, 1], [], []>} : vector<48x288xbf16>, vector<288x32xbf16>, vector<48x32xf32> -> vector<48x32xf32>
    %c1 = arith.constant 1 : index
    %c0_9 = arith.constant 0 : index
    %11 = vector.load %arg4[%c1, %c0_9] : memref<8x288xf32, #tpu.memory_space<vmem>>, vector<1x32xf32>
    %12 = vector.broadcast %11 : vector<1x32xf32> to vector<48x32xf32>
    %13 = arith.addf %10, %12 : vector<48x32xf32>
    %cst_10 = arith.constant 0.000000e+00 : f32
    %14 = vector.broadcast %cst_10 : f32 to vector<48x32xf32>
    %15 = arith.maximumf %13, %14 : vector<48x32xf32>
    %cst_11 = arith.constant 0.000000e+00 : f32
    %16 = vector.broadcast %cst_11 : f32 to vector<8x32xf32>
    %c288 = arith.constant 288 : index
    %c0_12 = arith.constant 0 : index
    %17 = vector.load %arg3[%c288, %c0_12] : memref<560x32xbf16, #tpu.memory_space<vmem>>, vector<32x32xbf16>
    %18 = vector.extract_strided_slice %15 {offsets = [0, 0], sizes = [8, 32], strides = [1, 1]} : vector<48x32xf32> to vector<8x32xf32>
    %19 = arith.truncf %18 : vector<8x32xf32> to vector<8x32xbf16>
    %cst_13 = arith.constant dense<0.000000e+00> : vector<8x32xf32>
    %20 = tpu.matmul %19, %17, %cst_13 {dimension_numbers = #tpu.dot_dimension_numbers<[1], [0], [0], [1], [0, 0, 1, 1], [], []>} : vector<8x32xbf16>, vector<32x32xbf16>, vector<8x32xf32> -> vector<8x32xf32>
    %21 = arith.addf %16, %20 : vector<8x32xf32>
    %c320 = arith.constant 320 : index
    %c0_14 = arith.constant 0 : index
    %22 = vector.load %arg3[%c320, %c0_14] : memref<560x32xbf16, #tpu.memory_space<vmem>>, vector<32x32xbf16>
    %23 = vector.extract_strided_slice %15 {offsets = [8, 0], sizes = [8, 32], strides = [1, 1]} : vector<48x32xf32> to vector<8x32xf32>
    %24 = arith.truncf %23 : vector<8x32xf32> to vector<8x32xbf16>
    %cst_15 = arith.constant dense<0.000000e+00> : vector<8x32xf32>
    %25 = tpu.matmul %24, %22, %cst_15 {dimension_numbers = #tpu.dot_dimension_numbers<[1], [0], [0], [1], [0, 0, 1, 1], [], []>} : vector<8x32xbf16>, vector<32x32xbf16>, vector<8x32xf32> -> vector<8x32xf32>
    %26 = arith.addf %21, %25 : vector<8x32xf32>
    %c352 = arith.constant 352 : index
    %c0_16 = arith.constant 0 : index
    %27 = vector.load %arg3[%c352, %c0_16] : memref<560x32xbf16, #tpu.memory_space<vmem>>, vector<32x32xbf16>
    %28 = vector.extract_strided_slice %15 {offsets = [16, 0], sizes = [8, 32], strides = [1, 1]} : vector<48x32xf32> to vector<8x32xf32>
    %29 = arith.truncf %28 : vector<8x32xf32> to vector<8x32xbf16>
    %cst_17 = arith.constant dense<0.000000e+00> : vector<8x32xf32>
    %30 = tpu.matmul %29, %27, %cst_17 {dimension_numbers = #tpu.dot_dimension_numbers<[1], [0], [0], [1], [0, 0, 1, 1], [], []>} : vector<8x32xbf16>, vector<32x32xbf16>, vector<8x32xf32> -> vector<8x32xf32>
    %31 = arith.addf %26, %30 : vector<8x32xf32>
    %c384 = arith.constant 384 : index
    %c0_18 = arith.constant 0 : index
    %32 = vector.load %arg3[%c384, %c0_18] : memref<560x32xbf16, #tpu.memory_space<vmem>>, vector<32x32xbf16>
    %33 = vector.extract_strided_slice %15 {offsets = [24, 0], sizes = [8, 32], strides = [1, 1]} : vector<48x32xf32> to vector<8x32xf32>
    %34 = arith.truncf %33 : vector<8x32xf32> to vector<8x32xbf16>
    %cst_19 = arith.constant dense<0.000000e+00> : vector<8x32xf32>
    %35 = tpu.matmul %34, %32, %cst_19 {dimension_numbers = #tpu.dot_dimension_numbers<[1], [0], [0], [1], [0, 0, 1, 1], [], []>} : vector<8x32xbf16>, vector<32x32xbf16>, vector<8x32xf32> -> vector<8x32xf32>
    %36 = arith.addf %31, %35 : vector<8x32xf32>
    %c416 = arith.constant 416 : index
    %c0_20 = arith.constant 0 : index
    %37 = vector.load %arg3[%c416, %c0_20] : memref<560x32xbf16, #tpu.memory_space<vmem>>, vector<32x32xbf16>
    %38 = vector.extract_strided_slice %15 {offsets = [32, 0], sizes = [8, 32], strides = [1, 1]} : vector<48x32xf32> to vector<8x32xf32>
    %39 = arith.truncf %38 : vector<8x32xf32> to vector<8x32xbf16>
    %cst_21 = arith.constant dense<0.000000e+00> : vector<8x32xf32>
    %40 = tpu.matmul %39, %37, %cst_21 {dimension_numbers = #tpu.dot_dimension_numbers<[1], [0], [0], [1], [0, 0, 1, 1], [], []>} : vector<8x32xbf16>, vector<32x32xbf16>, vector<8x32xf32> -> vector<8x32xf32>
    %41 = arith.addf %36, %40 : vector<8x32xf32>
    %c448 = arith.constant 448 : index
    %c0_22 = arith.constant 0 : index
    %42 = vector.load %arg3[%c448, %c0_22] : memref<560x32xbf16, #tpu.memory_space<vmem>>, vector<32x32xbf16>
    %43 = vector.extract_strided_slice %15 {offsets = [40, 0], sizes = [8, 32], strides = [1, 1]} : vector<48x32xf32> to vector<8x32xf32>
    %44 = arith.truncf %43 : vector<8x32xf32> to vector<8x32xbf16>
    %cst_23 = arith.constant dense<0.000000e+00> : vector<8x32xf32>
    %45 = tpu.matmul %44, %42, %cst_23 {dimension_numbers = #tpu.dot_dimension_numbers<[1], [0], [0], [1], [0, 0, 1, 1], [], []>} : vector<8x32xbf16>, vector<32x32xbf16>, vector<8x32xf32> -> vector<8x32xf32>
    %46 = arith.addf %41, %45 : vector<8x32xf32>
    %c2 = arith.constant 2 : index
    %c0_24 = arith.constant 0 : index
    %47 = vector.load %arg4[%c2, %c0_24] : memref<8x288xf32, #tpu.memory_space<vmem>>, vector<1x32xf32>
    %48 = vector.broadcast %47 : vector<1x32xf32> to vector<8x32xf32>
    %49 = arith.addf %46, %48 : vector<8x32xf32>
    %cst_25 = arith.constant 0.000000e+00 : f32
    %50 = vector.broadcast %cst_25 : f32 to vector<8x32xf32>
    %51 = arith.maximumf %49, %50 : vector<8x32xf32>
    %c480 = arith.constant 480 : index
    %c0_26 = arith.constant 0 : index
    %52 = vector.load %arg3[%c480, %c0_26] : memref<560x32xbf16, #tpu.memory_space<vmem>>, vector<32x32xbf16>
    %c512 = arith.constant 512 : index
    %c0_27 = arith.constant 0 : index
    %53 = vector.load %arg3[%c512, %c0_27] : memref<560x32xbf16, #tpu.memory_space<vmem>>, vector<16x32xbf16>
    %54 = arith.truncf %51 : vector<8x32xf32> to vector<8x32xbf16>
    %cst_28 = arith.constant dense<0.000000e+00> : vector<8x32xf32>
    %55 = tpu.matmul %54, %52, %cst_28 {dimension_numbers = #tpu.dot_dimension_numbers<[1], [0], [0], [1], [0, 0, 1, 1], [], []>} : vector<8x32xbf16>, vector<32x32xbf16>, vector<8x32xf32> -> vector<8x32xf32>
    %c0_29 = arith.constant 0 : index
    %c0_30 = arith.constant 0 : index
    %56 = vector.load %arg1[%c0_29, %c0_30] : memref<8x16xbf16, #tpu.memory_space<vmem>>, vector<8x16xbf16>
    %cst_31 = arith.constant dense<0.000000e+00> : vector<8x32xf32>
    %57 = tpu.matmul %56, %53, %cst_31 {dimension_numbers = #tpu.dot_dimension_numbers<[1], [0], [0], [1], [0, 0, 1, 1], [], []>} : vector<8x16xbf16>, vector<16x32xbf16>, vector<8x32xf32> -> vector<8x32xf32>
    %58 = arith.addf %55, %57 : vector<8x32xf32>
    %c3 = arith.constant 3 : index
    %c0_32 = arith.constant 0 : index
    %59 = vector.load %arg4[%c3, %c0_32] : memref<8x288xf32, #tpu.memory_space<vmem>>, vector<1x32xf32>
    %60 = vector.broadcast %59 : vector<1x32xf32> to vector<8x32xf32>
    %61 = arith.addf %58, %60 : vector<8x32xf32>
    %cst_33 = arith.constant 0.000000e+00 : f32
    %62 = vector.broadcast %cst_33 : f32 to vector<8x32xf32>
    %63 = arith.maximumf %61, %62 : vector<8x32xf32>
    %c528 = arith.constant 528 : index
    %c0_34 = arith.constant 0 : index
    %64 = vector.load %arg3[%c528, %c0_34] : memref<560x32xbf16, #tpu.memory_space<vmem>>, vector<32x32xbf16>
    %65 = arith.truncf %63 : vector<8x32xf32> to vector<8x32xbf16>
    %cst_35 = arith.constant dense<0.000000e+00> : vector<8x32xf32>
    %66 = tpu.matmul %65, %64, %cst_35 {dimension_numbers = #tpu.dot_dimension_numbers<[1], [0], [0], [1], [0, 0, 1, 1], [], []>} : vector<8x32xbf16>, vector<32x32xbf16>, vector<8x32xf32> -> vector<8x32xf32>
    %c4 = arith.constant 4 : index
    %c0_36 = arith.constant 0 : index
    %67 = vector.load %arg4[%c4, %c0_36] : memref<8x288xf32, #tpu.memory_space<vmem>>, vector<1x32xf32>
    %68 = vector.broadcast %67 : vector<1x32xf32> to vector<8x32xf32>
    %69 = arith.addf %66, %68 : vector<8x32xf32>
    %c0_37 = arith.constant 0 : index
    %c0_38 = arith.constant 0 : index
    %70 = vector.load %arg5[%c0_37, %c0_38] : memref<8x32xf32, #tpu.memory_space<vmem>>, vector<8x32xf32>
    tpu.vector_store %arg5[%c0_37, %c0_38], %69 {strides = array<i32>} : memref<8x32xf32, #tpu.memory_space<vmem>>, vector<8x32xf32>,
    return
  }
}

</mosaic_0001>

<llo_original>
// kernel: convnet_mlp_forward.1
$region0: #{convnet_mlp_forward.1}
  #allocation0 [shape = 'u32[]', space=smem, size = 0x4, offset = 0x4, fixed_abs, tag = 'smem constant byte address 0x4 - core index']
  #allocation1 [shape = 'u32[144,128]{1,0:T(1,128)}', space=vmem, size = 0x12000, scoped, tag = 'internal scratch']
  %s0 = inlined_call_operand.vmem [shape: bf16[48,324], index: 0, kind: input, shape index: {}]
  %s1 = inlined_call_operand.vmem [shape: bf16[8,16], index: 1, kind: input, shape index: {}]
  %s2 = inlined_call_operand.vmem [shape: bf16[324,288], index: 2, kind: input, shape index: {}]
  %s3 = inlined_call_operand.vmem [shape: bf16[560,32], index: 3, kind: input, shape index: {}]
  %s4 = inlined_call_operand.vmem [shape: f32[8,288], index: 4, kind: input, shape index: {}]
  %s5 = inlined_call_operand.hbm [shape: f32[8,32], index: 5, kind: output, shape index: {}]
  %s6 = sld [smem:[#allocation0]]
  $region30: #{convnet_mlp_forward.1} parent=0
    _
  %s8 = ssub.s32 1, %s6
  %s9 = scalar_select 0, %s8, %s6
  $region1: #{convnet_mlp_forward.1} parent=0
    #allocation2 [shape = 'u8[4096]{0}', space=vmem, size = 0x1000, scoped, tag = 'output window, operand 0, single buffered']
    #allocation3 [shape = 's32[1]{0}', space=sflag, size = 0x4, scoped, tag = 'scoped memory for convnet_mlp_forward.1']
    %10 = vsyncpa [#allocation3], 0
    // Predicated region
    $region2: #{convnet_mlp_forward.1} parent=1 // pred_check
      _
    $region3: #{convnet_mlp_forward.1} parent=1 // pred_check_branch
      %12 = sbr.rel (0) target = $region5
    $region4: #{convnet_mlp_forward.1} parent=1 // pred_region
      _
    $region5: #{convnet_mlp_forward.1} parent=1 // pred_fallthru
      _
    // Predicated region
    $region6: #{convnet_mlp_forward.1} parent=1 // pred_check
      _
    $region7: #{convnet_mlp_forward.1} parent=1 // pred_check_branch
      %14 = sbr.rel (0) target = $region9
    $region8: #{convnet_mlp_forward.1} parent=1 // pred_region
      _
    $region9: #{convnet_mlp_forward.1} parent=1 // pred_fallthru
      _
    // Predicated region
    $region10: #{convnet_mlp_forward.1} parent=1 // pred_check
      _
    $region11: #{convnet_mlp_forward.1} parent=1 // pred_check_branch
      %16 = sbr.rel (0) target = $region13
    $region12: #{convnet_mlp_forward.1} parent=1 // pred_region
      _
    $region13: #{convnet_mlp_forward.1} parent=1 // pred_fallthru
      _
    // Predicated region
    $region14: #{convnet_mlp_forward.1} parent=1 // pred_check
      _
    $region15: #{convnet_mlp_forward.1} parent=1 // pred_check_branch
      %18 = sbr.rel (0) target = $region17
    $region16: #{convnet_mlp_forward.1} parent=1 // pred_region
      _
    $region17: #{convnet_mlp_forward.1} parent=1 // pred_fallthru
      _
    // Predicated region
    $region18: #{convnet_mlp_forward.1} parent=1 // pred_check
      _
    $region19: #{convnet_mlp_forward.1} parent=1 // pred_check_branch
      %20 = sbr.rel (0) target = $region21
    $region20: #{convnet_mlp_forward.1} parent=1 // pred_region
      _
    $region21: #{convnet_mlp_forward.1} parent=1 // pred_fallthru
      _
    %v22 = vld [vmem:[%s0] sm:$0xff]
    %v23 = vld [vmem:[%s0 + $0x8] sm:$0xf]
    %v24 = vld [vmem:[%s0 + $0xc] sm:$0xff]
    %v25 = vld [vmem:[%s0 + $0x14] sm:$0xf]
    %v26 = vld [vmem:[%s0 + $0x18] sm:$0xff]
    %v27 = vld [vmem:[%s0 + $0x20] sm:$0xf]
    %v28 = vld [vmem:[%s0 + $0x24] sm:$0xff]
    %v29 = vld [vmem:[%s0 + $0x2c] sm:$0xf]
    %v30 = vld [vmem:[%s0 + $0x30] sm:$0xff]
    %v31 = vld [vmem:[%s0 + $0x38] sm:$0xf]
    %v32 = vld [vmem:[%s0 + $0x3c] sm:$0xff]
    %v33 = vld [vmem:[%s0 + $0x44] sm:$0xf]
    %v34 = vld [vmem:[%s2] sm:$0xff]
    %v35 = vld [vmem:[%s2 + $0x8] sm:$0xf]
    %v36 = vld [vmem:[%s2 + $0xc] sm:$0xff]
    %v37 = vld [vmem:[%s2 + $0x14] sm:$0xf]
    %v38 = vld [vmem:[%s2 + $0x18] sm:$0xff]
    %v39 = vld [vmem:[%s2 + $0x20] sm:$0xf]
    %v40 = vld [vmem:[%s2 + $0x24] sm:$0xff]
    %v41 = vld [vmem:[%s2 + $0x2c] sm:$0xf]
    %v42 = vld [vmem:[%s2 + $0x30] sm:$0xff]
    %v43 = vld [vmem:[%s2 + $0x38] sm:$0xf]
    %v44 = vld [vmem:[%s2 + $0x3c] sm:$0xff]
    %v45 = vld [vmem:[%s2 + $0x44] sm:$0xf]
    %v46 = vld [vmem:[%s2 + $0x48] sm:$0xff]
    %v47 = vld [vmem:[%s2 + $0x50] sm:$0xf]
    %v48 = vld [vmem:[%s2 + $0x54] sm:$0xff]
    %v49 = vld [vmem:[%s2 + $0x5c] sm:$0xf]
    %v50 = vld [vmem:[%s2 + $0x60] sm:$0xff]
    %v51 = vld [vmem:[%s2 + $0x68] sm:$0xf]
    %v52 = vld [vmem:[%s2 + $0x6c] sm:$0xff]
    %v53 = vld [vmem:[%s2 + $0x74] sm:$0xf]
    %v54 = vld [vmem:[%s2 + $0x78] sm:$0xff]
    %v55 = vld [vmem:[%s2 + $0x80] sm:$0xf]
    %v56 = vld [vmem:[%s2 + $0x84] sm:$0xff]
    %v57 = vld [vmem:[%s2 + $0x8c] sm:$0xf]
    %v58 = vld [vmem:[%s2 + $0x90] sm:$0xff]
    %v59 = vld [vmem:[%s2 + $0x98] sm:$0xf]
    %v60 = vld [vmem:[%s2 + $0x9c] sm:$0xff]
    %v61 = vld [vmem:[%s2 + $0xa4] sm:$0xf]
    %v62 = vld [vmem:[%s2 + $0xa8] sm:$0xff]
    %v63 = vld [vmem:[%s2 + $0xb0] sm:$0xf]
    %v64 = vld [vmem:[%s2 + $0xb4] sm:$0xff]
    %v65 = vld [vmem:[%s2 + $0xbc] sm:$0xf]
    %v66 = vld [vmem:[%s2 + $0xc0] sm:$0xff]
    %v67 = vld [vmem:[%s2 + $0xc8] sm:$0xf]
    %v68 = vld [vmem:[%s2 + $0xcc] sm:$0xff]
    %v69 = vld [vmem:[%s2 + $0xd4] sm:$0xf]
    %v70 = vld [vmem:[%s2 + $0xd8] sm:$0xff]
    %v71 = vld [vmem:[%s2 + $0xe0] sm:$0xf]
    %v72 = vld [vmem:[%s2 + $0xe4] sm:$0xff]
    %v73 = vld [vmem:[%s2 + $0xec] sm:$0xf]
    %v74 = vld [vmem:[%s2 + $0xf0] sm:$0xff]
    %v75 = vld [vmem:[%s2 + $0xf8] sm:$0xf]
    %v76 = vld [vmem:[%s2 + $0xfc] sm:$0xff]
    %v77 = vld [vmem:[%s2 + $0x104] sm:$0xf]
    %v78 = vld [vmem:[%s2 + $0x108] sm:$0xff]
    %v79 = vld [vmem:[%s2 + $0x110] sm:$0xf]
    %v80 = vld [vmem:[%s2 + $0x114] sm:$0xff]
    %v81 = vld [vmem:[%s2 + $0x11c] sm:$0xf]
    %v82 = vld [vmem:[%s2 + $0x120] sm:$0xff]
    %v83 = vld [vmem:[%s2 + $0x128] sm:$0xf]
    %v84 = vld [vmem:[%s2 + $0x12c] sm:$0xff]
    %v85 = vld [vmem:[%s2 + $0x134] sm:$0xf]
    %v86 = vld [vmem:[%s2 + $0x138] sm:$0xff]
    %v87 = vld [vmem:[%s2 + $0x140] sm:$0xf]
    %v88 = vld [vmem:[%s2 + $0x144] sm:$0xff]
    %v89 = vld [vmem:[%s2 + $0x14c] sm:$0xf]
    %v90 = vld [vmem:[%s2 + $0x150] sm:$0xff]
    %v91 = vld [vmem:[%s2 + $0x158] sm:$0xf]
    %v92 = vld [vmem:[%s2 + $0x15c] sm:$0xff]
    %v93 = vld [vmem:[%s2 + $0x164] sm:$0xf]
    %v94 = vld [vmem:[%s2 + $0x168] sm:$0xff]
    %v95 = vld [vmem:[%s2 + $0x170] sm:$0xf]
    %v96 = vld [vmem:[%s2 + $0x174] sm:$0xff]
    %v97 = vld [vmem:[%s2 + $0x17c] sm:$0xf]
    %v98 = vld [vmem:[%s2 + $0x180] sm:$0xff]
    %v99 = vld [vmem:[%s2 + $0x188] sm:$0xf]
    %v100 = vld [vmem:[%s2 + $0x18c] sm:$0xff]
    %v101 = vld [vmem:[%s2 + $0x194] sm:$0xf]
    %v102 = vld [vmem:[%s2 + $0x198] sm:$0xff]
    %v103 = vld [vmem:[%s2 + $0x1a0] sm:$0xf]
    %v104 = vld [vmem:[%s2 + $0x1a4] sm:$0xff]
    %v105 = vld [vmem:[%s2 + $0x1ac] sm:$0xf]
    %v106 = vld [vmem:[%s2 + $0x1b0] sm:$0xff]
    %v107 = vld [vmem:[%s2 + $0x1b8] sm:$0xf]
    %v108 = vld [vmem:[%s2 + $0x1bc] sm:$0xff]
    %v109 = vld [vmem:[%s2 + $0x1c4] sm:$0xf]
    %v110 = vld [vmem:[%s2 + $0x1c8] sm:$0xff]
    %v111 = vld [vmem:[%s2 + $0x1d0] sm:$0xf]
    %v112 = vld [vmem:[%s2 + $0x1d4] sm:$0xff]
    %v113 = vld [vmem:[%s2 + $0x1dc] sm:$0xf]
    %v114 = vld [vmem:[%s2 + $0x1e0] sm:$0x33]
    %v115 = vld [vmem:[%s2 + $0x1e8] sm:$0x3]
    %v116 = vld [vmem:[%s4] ss:$8 sm:$0x7]
    %v118 = vlaneseq
    %v119 = vshrl.u32 %v118, 7
    %v120 = vsub.s32 0, %v119
    %v121 = vrot.slane %v116, %v120
    %v122 = vlaneseq
    %v123 = vshrl.u32 %v122, 7
    %v124 = vsub.s32 1, %v123
    %v125 = vrot.slane %v116, %v124
    %v126 = vlaneseq
    %v127 = vshrl.u32 %v126, 7
    %v128 = vsub.s32 2, %v127
    %v129 = vrot.slane %v116, %v128
    %v145 = vunpack.c.l.b16 %v22
    %v146 = vunpack.c.h.b16 %v22
    %v147 = vunpack.c.l.b16 %v23
    %v148 = vunpack.c.l.b16 %v24
    %v149 = vunpack.c.h.b16 %v24
    %v150 = vunpack.c.l.b16 %v25
    %v151 = vunpack.c.l.b16 %v26
    %v152 = vunpack.c.h.b16 %v26
    %v153 = vunpack.c.l.b16 %v27
    %v154 = vunpack.c.l.b16 %v28
    %v155 = vunpack.c.h.b16 %v28
    %v156 = vunpack.c.l.b16 %v29
    %v157 = vunpack.c.l.b16 %v30
    %v158 = vunpack.c.h.b16 %v30
    %v159 = vunpack.c.l.b16 %v31
    %v160 = vunpack.c.l.b16 %v32
    %v161 = vunpack.c.h.b16 %v32
    %v162 = vunpack.c.l.b16 %v33
    %v163 = vpack.c.b16 %v148, %v145
    %v164 = vpack.c.b16 %v149, %v146
    %v165 = vpack.c.b16 %v150, %v147
    %v166 = vpack.c.b16 %v154, %v151
    %v167 = vpack.c.b16 %v155, %v152
    %v168 = vpack.c.b16 %v156, %v153
    %v169 = vpack.c.b16 %v160, %v157
    %v170 = vpack.c.b16 %v161, %v158
    %v171 = vpack.c.b16 %v162, %v159
    %v260 = vunpack.c.l.b16 %v34
    %v261 = vunpack.c.h.b16 %v34
    %v262 = vunpack.c.l.b16 %v35
    %v263 = vunpack.c.l.b16 %v36
    %v264 = vunpack.c.h.b16 %v36
    %v265 = vunpack.c.l.b16 %v37
    %v266 = vunpack.c.l.b16 %v38
    %v267 = vunpack.c.h.b16 %v38
    %v268 = vunpack.c.l.b16 %v39
    %v269 = vunpack.c.l.b16 %v40
    %v270 = vunpack.c.h.b16 %v40
    %v271 = vunpack.c.l.b16 %v41
    %v272 = vunpack.c.l.b16 %v42
    %v273 = vunpack.c.h.b16 %v42
    %v274 = vunpack.c.l.b16 %v43
    %v275 = vunpack.c.l.b16 %v44
    %v276 = vunpack.c.h.b16 %v44
    %v277 = vunpack.c.l.b16 %v45
    %v278 = vunpack.c.l.b16 %v46
    %v279 = vunpack.c.h.b16 %v46
    %v280 = vunpack.c.l.b16 %v47
    %v281 = vunpack.c.l.b16 %v48
    %v282 = vunpack.c.h.b16 %v48
    %v283 = vunpack.c.l.b16 %v49
    %v284 = vunpack.c.l.b16 %v50
    %v285 = vunpack.c.h.b16 %v50
    %v286 = vunpack.c.l.b16 %v51
    %v287 = vunpack.c.l.b16 %v52
    %v288 = vunpack.c.h.b16 %v52
    %v289 = vunpack.c.l.b16 %v53
    %v290 = vunpack.c.l.b16 %v54
    %v291 = vunpack.c.h.b16 %v54
    %v292 = vunpack.c.l.b16 %v55
    %v293 = vunpack.c.l.b16 %v56
    %v294 = vunpack.c.h.b16 %v56
    %v295 = vunpack.c.l.b16 %v57
    %v296 = vunpack.c.l.b16 %v58
    %v297 = vunpack.c.h.b16 %v58
    %v298 = vunpack.c.l.b16 %v59
    %v299 = vunpack.c.l.b16 %v60
    %v300 = vunpack.c.h.b16 %v60
    %v301 = vunpack.c.l.b16 %v61
    %v302 = vunpack.c.l.b16 %v62
    %v303 = vunpack.c.h.b16 %v62
    %v304 = vunpack.c.l.b16 %v63
    %v305 = vunpack.c.l.b16 %v64
    %v306 = vunpack.c.h.b16 %v64
    %v307 = vunpack.c.l.b16 %v65
    %v308 = vunpack.c.l.b16 %v66
    %v309 = vunpack.c.h.b16 %v66
    %v310 = vunpack.c.l.b16 %v67
    %v311 = vunpack.c.l.b16 %v68
    %v312 = vunpack.c.h.b16 %v68
    %v313 = vunpack.c.l.b16 %v69
    %v314 = vunpack.c.l.b16 %v70
    %v315 = vunpack.c.h.b16 %v70
    %v316 = vunpack.c.l.b16 %v71
    %v317 = vunpack.c.l.b16 %v72
    %v318 = vunpack.c.h.b16 %v72
    %v319 = vunpack.c.l.b16 %v73
    %v320 = vunpack.c.l.b16 %v74
    %v321 = vunpack.c.h.b16 %v74
    %v322 = vunpack.c.l.b16 %v75
    %v323 = vunpack.c.l.b16 %v76
    %v324 = vunpack.c.h.b16 %v76
    %v325 = vunpack.c.l.b16 %v77
    %v326 = vunpack.c.l.b16 %v78
    %v327 = vunpack.c.h.b16 %v78
    %v328 = vunpack.c.l.b16 %v79
    %v329 = vunpack.c.l.b16 %v80
    %v330 = vunpack.c.h.b16 %v80
    %v331 = vunpack.c.l.b16 %v81
    %v332 = vunpack.c.l.b16 %v82
    %v333 = vunpack.c.h.b16 %v82
    %v334 = vunpack.c.l.b16 %v83
    %v335 = vunpack.c.l.b16 %v84
    %v336 = vunpack.c.h.b16 %v84
    %v337 = vunpack.c.l.b16 %v85
    %v338 = vunpack.c.l.b16 %v86
    %v339 = vunpack.c.h.b16 %v86
    %v340 = vunpack.c.l.b16 %v87
    %v341 = vunpack.c.l.b16 %v88
    %v342 = vunpack.c.h.b16 %v88
    %v343 = vunpack.c.l.b16 %v89
    %v344 = vunpack.c.l.b16 %v90
    %v345 = vunpack.c.h.b16 %v90
    %v346 = vunpack.c.l.b16 %v91
    %v347 = vunpack.c.l.b16 %v92
    %v348 = vunpack.c.h.b16 %v92
    %v349 = vunpack.c.l.b16 %v93
    %v350 = vunpack.c.l.b16 %v94
    %v351 = vunpack.c.h.b16 %v94
    %v352 = vunpack.c.l.b16 %v95
    %v353 = vunpack.c.l.b16 %v96
    %v354 = vunpack.c.h.b16 %v96
    %v355 = vunpack.c.l.b16 %v97
    %v356 = vunpack.c.l.b16 %v98
    %v357 = vunpack.c.h.b16 %v98
    %v358 = vunpack.c.l.b16 %v99
    %v359 = vunpack.c.l.b16 %v100
    %v360 = vunpack.c.h.b16 %v100
    %v361 = vunpack.c.l.b16 %v101
    %v362 = vunpack.c.l.b16 %v102
    %v363 = vunpack.c.h.b16 %v102
    %v364 = vunpack.c.l.b16 %v103
    %v365 = vunpack.c.l.b16 %v104
    %v366 = vunpack.c.h.b16 %v104
    %v367 = vunpack.c.l.b16 %v105
    %v368 = vunpack.c.l.b16 %v106
    %v369 = vunpack.c.h.b16 %v106
    %v370 = vunpack.c.l.b16 %v107
    %v371 = vunpack.c.l.b16 %v108
    %v372 = vunpack.c.h.b16 %v108
    %v373 = vunpack.c.l.b16 %v109
    %v374 = vunpack.c.l.b16 %v110
    %v375 = vunpack.c.h.b16 %v110
    %v376 = vunpack.c.l.b16 %v111
    %v377 = vunpack.c.l.b16 %v112
    %v378 = vunpack.c.h.b16 %v112
    %v379 = vunpack.c.l.b16 %v113
    %v380 = vunpack.c.l.b16 %v114
    %v381 = vunpack.c.h.b16 %v114
    %v382 = vunpack.c.l.b16 %v115
    %v383 = vpack.c.b16 %v263, %v260
    %v384 = vpack.c.b16 %v264, %v261
    %v385 = vpack.c.b16 %v265, %v262
    %v386 = vpack.c.b16 %v269, %v266
    %v387 = vpack.c.b16 %v270, %v267
    %v388 = vpack.c.b16 %v271, %v268
    %v389 = vpack.c.b16 %v275, %v272
    %v390 = vpack.c.b16 %v276, %v273
    %v391 = vpack.c.b16 %v277, %v274
    %v392 = vpack.c.b16 %v281, %v278
    %v393 = vpack.c.b16 %v282, %v279
    %v394 = vpack.c.b16 %v283, %v280
    %v395 = vpack.c.b16 %v287, %v284
    %v396 = vpack.c.b16 %v288, %v285
    %v397 = vpack.c.b16 %v289, %v286
    %v398 = vpack.c.b16 %v293, %v290
    %v399 = vpack.c.b16 %v294, %v291
    %v400 = vpack.c.b16 %v295, %v292
    %v401 = vpack.c.b16 %v299, %v296
    %v402 = vpack.c.b16 %v300, %v297
    %v403 = vpack.c.b16 %v301, %v298
    %v404 = vpack.c.b16 %v305, %v302
    %v405 = vpack.c.b16 %v306, %v303
    %v406 = vpack.c.b16 %v307, %v304
    %v407 = vpack.c.b16 %v311, %v308
    %v408 = vpack.c.b16 %v312, %v309
    %v409 = vpack.c.b16 %v313, %v310
    %v410 = vpack.c.b16 %v317, %v314
    %v411 = vpack.c.b16 %v318, %v315
    %v412 = vpack.c.b16 %v319, %v316
    %v413 = vpack.c.b16 %v323, %v320
    %v414 = vpack.c.b16 %v324, %v321
    %v415 = vpack.c.b16 %v325, %v322
    %v416 = vpack.c.b16 %v329, %v326
    %v417 = vpack.c.b16 %v330, %v327
    %v418 = vpack.c.b16 %v331, %v328
    %v419 = vpack.c.b16 %v335, %v332
    %v420 = vpack.c.b16 %v336, %v333
    %v421 = vpack.c.b16 %v337, %v334
    %v422 = vpack.c.b16 %v341, %v338
    %v423 = vpack.c.b16 %v342, %v339
    %v424 = vpack.c.b16 %v343, %v340
    %v425 = vpack.c.b16 %v347, %v344
    %v426 = vpack.c.b16 %v348, %v345
    %v427 = vpack.c.b16 %v349, %v346
    %v428 = vpack.c.b16 %v353, %v350
    %v429 = vpack.c.b16 %v354, %v351
    %v430 = vpack.c.b16 %v355, %v352
    %v431 = vpack.c.b16 %v359, %v356
    %v432 = vpack.c.b16 %v360, %v357
    %v433 = vpack.c.b16 %v361, %v358
    %v434 = vpack.c.b16 %v365, %v362
    %v435 = vpack.c.b16 %v366, %v363
    %v436 = vpack.c.b16 %v367, %v364
    %v437 = vpack.c.b16 %v371, %v368
    %v438 = vpack.c.b16 %v372, %v369
    %v439 = vpack.c.b16 %v373, %v370
    %v440 = vpack.c.b16 %v377, %v374
    %v441 = vpack.c.b16 %v378, %v375
    %v442 = vpack.c.b16 %v379, %v376
    %v443 = vpack.c.b16 %v380, %v380
    %v444 = vpack.c.b16 %v381, %v381
    %v445 = vpack.c.b16 %v382, %v382
    %vm506 = vcmask 556032
    %v508 = vsel %vm506, %v165, 0
    %v511 = vsel %vm506, %v168, 0
    %v514 = vsel %vm506, %v171, 0
    %vm516 = vcmask 1041408
    %v518 = vsel %vm516, %v443, 0
    %v521 = vsel %vm516, %v444, 0
    %v524 = vsel %vm516, %v445, 0
    %526 = vmatprep.subr.bf16.mxu0 %v384
    %527 = vmatpush1.bf16.msra.mxu0 %v383
    %528 = vmatprep.subr.bf16.mxu0 %v387
    %529 = vmatpush1.bf16.msra.mxu0 %v386
    %530 = vmatprep.subr.bf16.mxu0 %v390
    %531 = vmatpush1.bf16.msra.mxu0 %v389
    %532 = vmatprep.subr.bf16.mxu0 %v393
    %533 = vmatpush1.bf16.msra.mxu0 %v392
    %534 = vmatprep.subr.bf16.mxu0 %v396
    %535 = vmatpush1.bf16.msra.mxu0 %v395
    %536 = vmatprep.subr.bf16.mxu0 %v399
    %537 = vmatpush1.bf16.msra.mxu0 %v398
    %538 = vmatprep.subr.bf16.mxu0 %v402
    %539 = vmatpush1.bf16.msra.mxu0 %v401
    %540 = vmatprep.subr.bf16.mxu0 %v405
    %541 = vmatpush1.bf16.msra.mxu0 %v404
    %542 = vmatprep.subr.bf16.mxu0 %v408
    %543 = vmatpush1.bf16.msra.mxu0 %v407
    %544 = vmatprep.subr.bf16.mxu0 %v411
    %545 = vmatpush1.bf16.msra.mxu0 %v410
    %546 = vmatprep.subr.bf16.mxu0 %v414
    %547 = vmatpush1.bf16.msra.mxu0 %v413
    %548 = vmatprep.subr.bf16.mxu0 %v417
    %549 = vmatpush1.bf16.msra.mxu0 %v416
    %550 = vmatprep.subr.bf16.mxu0 %v420
    %551 = vmatpush1.bf16.msra.mxu0 %v419
    %552 = vmatprep.subr.bf16.mxu0 %v423
    %553 = vmatpush1.bf16.msra.mxu0 %v422
    %554 = vmatprep.subr.bf16.mxu0 %v426
    %555 = vmatpush1.bf16.msra.mxu0 %v425
    %556 = vmatprep.subr.bf16.mxu0 %v429
    %557 = vmatpush1.bf16.msra.mxu0 %v428
    %558 = vmatprep.mubr.bf16.mxu0 %v164
    %559 = vmatmul.mubr.bf16.gmra.mrb[0].mxu0 %v163
    %v560 = vpop.f32.mrb[0].mxu0
    %v561 = vadd.f32 %v121, %v560
    %v562 = vpop.f32.mrb[0].mxu0
    %v563 = vadd.f32 %v125, %v562
    %v564 = vpop.f32.mrb[0].mxu0
    %v565 = vadd.f32 %v121, %v564
    %v566 = vpop.f32.mrb[0].mxu0
    %v567 = vadd.f32 %v125, %v566
    %568 = vmatprep.mubr.bf16.mxu0 %v167
    %569 = vmatmul.mubr.bf16.gmra.mrb[0].mxu0 %v166
    %v570 = vpop.f32.mrb[0].mxu0
    %v571 = vadd.f32 %v121, %v570
    %v572 = vpop.f32.mrb[0].mxu0
    %v573 = vadd.f32 %v125, %v572
    %v574 = vpop.f32.mrb[0].mxu0
    %v575 = vadd.f32 %v121, %v574
    %v576 = vpop.f32.mrb[0].mxu0
    %v577 = vadd.f32 %v125, %v576
    %578 = vmatprep.mubr.bf16.mxu0 %v170
    %579 = vmatmul.mubr.bf16.gmra.mrb[0].mxu0 %v169
    %v580 = vpop.f32.mrb[0].mxu0
    %v581 = vadd.f32 %v121, %v580
    %v582 = vpop.f32.mrb[0].mxu0
    %v583 = vadd.f32 %v125, %v582
    %v584 = vpop.f32.mrb[0].mxu0
    %v585 = vadd.f32 %v121, %v584
    %v586 = vpop.f32.mrb[0].mxu0
    %v587 = vadd.f32 %v125, %v586
    %588 = vdwg.mxu0
    %589 = vmatprep.subr.bf16.mxu0 %v432
    %590 = vmatpush1.bf16.msra.mxu0 %v431
    %591 = vmatprep.subr.bf16.mxu0 %v435
    %592 = vmatpush1.bf16.msra.mxu0 %v434
    %593 = vmatprep.subr.bf16.mxu0 %v438
    %594 = vmatpush1.bf16.msra.mxu0 %v437
    %595 = vmatprep.subr.bf16.mxu0 %v441
    %596 = vmatpush1.bf16.msra.mxu0 %v440
    %597 = vmatprep.subr.bf16.mxu0 %v521
    %598 = vmatpush1.bf16.msra.mxu0 %v518
    %599 = vmatprep.subr.bf16.mxu0 0
    %600 = vmatpush1.bf16.msra.mxu0 0
    %601 = vmatprep.subr.bf16.mxu0 0
    %602 = vmatpush1.bf16.msra.mxu0 0
    %603 = vmatprep.subr.bf16.mxu0 0
    %604 = vmatpush1.bf16.msra.mxu0 0
    %605 = vmatprep.subr.bf16.mxu0 0
    %606 = vmatpush1.bf16.msra.mxu0 0
    %607 = vmatprep.subr.bf16.mxu0 0
    %608 = vmatpush1.bf16.msra.mxu0 0
    %609 = vmatprep.subr.bf16.mxu0 0
    %610 = vmatpush1.bf16.msra.mxu0 0
    %611 = vmatprep.subr.bf16.mxu0 0
    %612 = vmatpush1.bf16.msra.mxu0 0
    %613 = vmatprep.subr.bf16.mxu0 0
    %614 = vmatpush1.bf16.msra.mxu0 0
    %615 = vmatprep.subr.bf16.mxu0 0
    %616 = vmatpush1.bf16.msra.mxu0 0
    %617 = vmatprep.subr.bf16.mxu0 0
    %618 = vmatpush1.bf16.msra.mxu0 0
    %619 = vmatprep.subr.bf16.mxu0 0
    %620 = vmatpush1.bf16.msra.mxu0 0
    %621 = vmatprep.mubr.bf16.mxu0 0
    %622 = vmatmul.mubr.bf16.gmra.mrb[0].mxu0 %v508
    %v623 = vpop.f32.mrb[0].mxu0
    %v624 = vadd.f32 %v561, %v623
    %v625 = vpop.f32.mrb[0].mxu0
    %v626 = vadd.f32 %v563, %v625
    %v627 = vpop.f32.mrb[0].mxu0
    %v628 = vadd.f32 %v565, %v627
    %v629 = vpop.f32.mrb[0].mxu0
    %v630 = vadd.f32 %v567, %v629
    %631 = vmatprep.mubr.bf16.mxu0 0
    %632 = vmatmul.mubr.bf16.gmra.mrb[0].mxu0 %v511
    %v633 = vpop.f32.mrb[0].mxu0
    %v634 = vadd.f32 %v571, %v633
    %v635 = vpop.f32.mrb[0].mxu0
    %v636 = vadd.f32 %v573, %v635
    %v637 = vpop.f32.mrb[0].mxu0
    %v638 = vadd.f32 %v575, %v637
    %v639 = vpop.f32.mrb[0].mxu0
    %v640 = vadd.f32 %v577, %v639
    %641 = vmatprep.mubr.bf16.mxu0 0
    %642 = vmatmul.mubr.bf16.gmra.mrb[0].mxu0 %v514
    %v643 = vpop.f32.mrb[0].mxu0
    %v644 = vadd.f32 %v581, %v643
    %v645 = vpop.f32.mrb[0].mxu0
    %v646 = vadd.f32 %v583, %v645
    %v647 = vpop.f32.mrb[0].mxu0
    %v648 = vadd.f32 %v585, %v647
    %v649 = vpop.f32.mrb[0].mxu0
    %v650 = vadd.f32 %v587, %v649
    %651 = vdwg.mxu0
    %652 = vmatprep.subr.bf16.mxu0 0
    %653 = vmatpush1.bf16.msra.mxu0 %v385
    %654 = vmatprep.subr.bf16.mxu0 0
    %655 = vmatpush1.bf16.msra.mxu0 %v388
    %656 = vmatprep.subr.bf16.mxu0 0
    %657 = vmatpush1.bf16.msra.mxu0 %v391
    %658 = vmatprep.subr.bf16.mxu0 0
    %659 = vmatpush1.bf16.msra.mxu0 %v394
    %660 = vmatprep.subr.bf16.mxu0 0
    %661 = vmatpush1.bf16.msra.mxu0 %v397
    %662 = vmatprep.subr.bf16.mxu0 0
    %663 = vmatpush1.bf16.msra.mxu0 %v400
    %664 = vmatprep.subr.bf16.mxu0 0
    %665 = vmatpush1.bf16.msra.mxu0 %v403
    %666 = vmatprep.subr.bf16.mxu0 0
    %667 = vmatpush1.bf16.msra.mxu0 %v406
    %668 = vmatprep.subr.bf16.mxu0 0
    %669 = vmatpush1.bf16.msra.mxu0 %v409
    %670 = vmatprep.subr.bf16.mxu0 0
    %671 = vmatpush1.bf16.msra.mxu0 %v412
    %672 = vmatprep.subr.bf16.mxu0 0
    %673 = vmatpush1.bf16.msra.mxu0 %v415
    %674 = vmatprep.subr.bf16.mxu0 0
    %675 = vmatpush1.bf16.msra.mxu0 %v418
    %676 = vmatprep.subr.bf16.mxu0 0
    %677 = vmatpush1.bf16.msra.mxu0 %v421
    %678 = vmatprep.subr.bf16.mxu0 0
    %679 = vmatpush1.bf16.msra.mxu0 %v424
    %680 = vmatprep.subr.bf16.mxu0 0
    %681 = vmatpush1.bf16.msra.mxu0 %v427
    %682 = vmatprep.subr.bf16.mxu0 0
    %683 = vmatpush1.bf16.msra.mxu0 %v430
    %684 = vmatprep.mubr.bf16.mxu0 %v164
    %685 = vmatmul.mubr.bf16.gmra.mrb[0].mxu0 %v163
    %v686 = vpop.f32.mrb[0].mxu0
    %v687 = vadd.f32 %v129, %v686
    %v688 = vpop.f32.mrb[0].mxu0
    %v689 = vpop.f32.mrb[0].mxu0
    %v690 = vadd.f32 %v129, %v689
    %v691 = vpop.f32.mrb[0].mxu0
    %692 = vmatprep.mubr.bf16.mxu0 %v167
    %693 = vmatmul.mubr.bf16.gmra.mrb[0].mxu0 %v166
    %v694 = vpop.f32.mrb[0].mxu0
    %v695 = vadd.f32 %v129, %v694
    %v696 = vpop.f32.mrb[0].mxu0
    %v697 = vpop.f32.mrb[0].mxu0
    %v698 = vadd.f32 %v129, %v697
    %v699 = vpop.f32.mrb[0].mxu0
    %700 = vmatprep.mubr.bf16.mxu0 %v170
    %701 = vmatmul.mubr.bf16.gmra.mrb[0].mxu0 %v169
    %v702 = vpop.f32.mrb[0].mxu0
    %v703 = vadd.f32 %v129, %v702
    %v704 = vpop.f32.mrb[0].mxu0
    %v705 = vpop.f32.mrb[0].mxu0
    %v706 = vadd.f32 %v129, %v705
    %v707 = vpop.f32.mrb[0].mxu0
    %708 = vdwg.mxu0
    %709 = vmatprep.subr.bf16.mxu0 0
    %710 = vmatpush1.bf16.msra.mxu0 %v433
    %711 = vmatprep.subr.bf16.mxu0 0
    %712 = vmatpush1.bf16.msra.mxu0 %v436
    %713 = vmatprep.subr.bf16.mxu0 0
    %714 = vmatpush1.bf16.msra.mxu0 %v439
    %715 = vmatprep.subr.bf16.mxu0 0
    %716 = vmatpush1.bf16.msra.mxu0 %v442
    %717 = vmatprep.subr.bf16.mxu0 0
    %718 = vmatpush1.bf16.msra.mxu0 %v524
    %719 = vmatprep.subr.bf16.mxu0 0
    %720 = vmatpush1.bf16.msra.mxu0 0
    %721 = vmatprep.subr.bf16.mxu0 0
    %722 = vmatpush1.bf16.msra.mxu0 0
    %723 = vmatprep.subr.bf16.mxu0 0
    %724 = vmatpush1.bf16.msra.mxu0 0
    %725 = vmatprep.subr.bf16.mxu0 0
    %726 = vmatpush1.bf16.msra.mxu0 0
    %727 = vmatprep.subr.bf16.mxu0 0
    %728 = vmatpush1.bf16.msra.mxu0 0
    %729 = vmatprep.subr.bf16.mxu0 0
    %730 = vmatpush1.bf16.msra.mxu0 0
    %731 = vmatprep.subr.bf16.mxu0 0
    %732 = vmatpush1.bf16.msra.mxu0 0
    %733 = vmatprep.subr.bf16.mxu0 0
    %734 = vmatpush1.bf16.msra.mxu0 0
    %735 = vmatprep.subr.bf16.mxu0 0
    %736 = vmatpush1.bf16.msra.mxu0 0
    %737 = vmatprep.subr.bf16.mxu0 0
    %738 = vmatpush1.bf16.msra.mxu0 0
    %739 = vmatprep.subr.bf16.mxu0 0
    %740 = vmatpush1.bf16.msra.mxu0 0
    %741 = vmatprep.mubr.bf16.mxu0 0
    %742 = vmatmul.mubr.bf16.gmra.mrb[0].mxu0 %v508
    %v743 = vpop.f32.mrb[0].mxu0
    %v744 = vadd.f32 %v687, %v743
    %v745 = vpop.f32.mrb[0].mxu0
    %v746 = vpop.f32.mrb[0].mxu0
    %v747 = vadd.f32 %v690, %v746
    %v748 = vpop.f32.mrb[0].mxu0
    %749 = vmatprep.mubr.bf16.mxu0 0
    %750 = vmatmul.mubr.bf16.gmra.mrb[0].mxu0 %v511
    %v751 = vpop.f32.mrb[0].mxu0
    %v752 = vadd.f32 %v695, %v751
    %v753 = vpop.f32.mrb[0].mxu0
    %v754 = vpop.f32.mrb[0].mxu0
    %v755 = vadd.f32 %v698, %v754
    %v756 = vpop.f32.mrb[0].mxu0
    %757 = vmatprep.mubr.bf16.mxu0 0
    %758 = vmatmul.mubr.bf16.gmra.mrb[0].mxu0 %v514
    %v759 = vpop.f32.mrb[0].mxu0
    %v760 = vadd.f32 %v703, %v759
    %v761 = vpop.f32.mrb[0].mxu0
    %v762 = vpop.f32.mrb[0].mxu0
    %v763 = vadd.f32 %v706, %v762
    %v764 = vpop.f32.mrb[0].mxu0
    %765 = vdwg.mxu0
    %v766 = vmax.f32 %v624, 0.0
    %v767 = vmax.f32 %v626, 0.0
    %v768 = vmax.f32 %v744, 0.0
    %v769 = vmax.f32 %v628, 0.0
    %v770 = vmax.f32 %v630, 0.0
    %v771 = vmax.f32 %v747, 0.0
    %v772 = vmax.f32 %v634, 0.0
    %v773 = vmax.f32 %v636, 0.0
    %v774 = vmax.f32 %v752, 0.0
    %v775 = vmax.f32 %v638, 0.0
    %v776 = vmax.f32 %v640, 0.0
    %v777 = vmax.f32 %v755, 0.0
    %v778 = vmax.f32 %v644, 0.0
    %v779 = vmax.f32 %v646, 0.0
    %v780 = vmax.f32 %v760, 0.0
    %v781 = vmax.f32 %v648, 0.0
    %v782 = vmax.f32 %v650, 0.0
    %v783 = vmax.f32 %v763, 0.0
    %v784 = vld [vmem:[%s3] sm:$0xf]
    %v785 = vld [vmem:[%s3 + $0x4] sm:$0xf]
    %v786 = vld [vmem:[%s3 + $0x8] sm:$0xf]
    %v787 = vld [vmem:[%s3 + $0xc] sm:$0xf]
    %v788 = vld [vmem:[%s3 + $0x10] sm:$0xf]
    %v789 = vld [vmem:[%s3 + $0x14] sm:$0xf]
    %v790 = vld [vmem:[%s3 + $0x18] sm:$0xf]
    %v791 = vld [vmem:[%s3 + $0x1c] sm:$0xf]
    %v792 = vld [vmem:[%s3 + $0x20] sm:$0xf]
    %v793 = vld [vmem:[%s3 + $0x24] sm:$0xf]
    %v794 = vld [vmem:[%s3 + $0x28] sm:$0xf]
    %v795 = vld [vmem:[%s3 + $0x2c] sm:$0xf]
    %v796 = vld [vmem:[%s3 + $0x30] sm:$0xf]
    %v797 = vld [vmem:[%s3 + $0x34] sm:$0xf]
    %v798 = vld [vmem:[%s3 + $0x38] sm:$0xf]
    %v799 = vld [vmem:[%s3 + $0x3c] sm:$0xf]
    %v800 = vld [vmem:[%s3 + $0x40] sm:$0xf]
    %v801 = vld [vmem:[%s3 + $0x44] sm:$0xf]
    %v802 = vld [vmem:[%s3 + $0x48] sm:$0xf]
    %v803 = vld [vmem:[%s3 + $0x4c] sm:$0xf]
    %v804 = vld [vmem:[%s3 + $0x50] sm:$0xf]
    %v805 = vld [vmem:[%s3 + $0x54] sm:$0xf]
    %v806 = vld [vmem:[%s3 + $0x58] sm:$0xf]
    %v807 = vld [vmem:[%s3 + $0x5c] sm:$0xf]
    %v808 = vld [vmem:[%s3 + $0x60] sm:$0xf]
    %v809 = vld [vmem:[%s3 + $0x64] sm:$0xf]
    %v810 = vld [vmem:[%s3 + $0x68] sm:$0xf]
    %v811 = vld [vmem:[%s3 + $0x6c] sm:$0xf]
    %v812 = vld [vmem:[%s3 + $0x70] sm:$0xf]
    %v813 = vld [vmem:[%s3 + $0x74] sm:$0xf]
    %v814 = vld [vmem:[%s3 + $0x78] sm:$0xf]
    %v815 = vld [vmem:[%s3 + $0x7c] sm:$0xf]
    %v816 = vld [vmem:[%s3 + $0x80] sm:$0xf]
    %v817 = vld [vmem:[%s3 + $0x84] sm:$0xf]
    %v818 = vld [vmem:[%s3 + $0x88] sm:$0xf]
    %v819 = vld [vmem:[%s3 + $0x8c] sm:$0xf]
    %v820 = vpack.c.bf16 %v769, %v766
    %v821 = vpack.c.bf16 %v770, %v767
    %v822 = vpack.c.bf16 %v771, %v768
    %v823 = vpack.c.bf16 %v775, %v772
    %v824 = vpack.c.bf16 %v776, %v773
    %v825 = vpack.c.bf16 %v777, %v774
    %v826 = vpack.c.bf16 %v781, %v778
    %v827 = vpack.c.bf16 %v782, %v779
    %v828 = vpack.c.bf16 %v783, %v780
    %v829 = vld [vmem:[%s4 + $0x1] ss:$0 sm:$0xff]
    %v866 = vunpack.c.l.b16 %v784
    %v867 = vunpack.c.l.b16 %v785
    %v868 = vunpack.c.l.b16 %v786
    %v869 = vunpack.c.l.b16 %v787
    %v870 = vunpack.c.l.b16 %v788
    %v871 = vunpack.c.l.b16 %v789
    %v872 = vunpack.c.l.b16 %v790
    %v873 = vunpack.c.l.b16 %v791
    %v874 = vunpack.c.l.b16 %v792
    %v875 = vunpack.c.l.b16 %v793
    %v876 = vunpack.c.l.b16 %v794
    %v877 = vunpack.c.l.b16 %v795
    %v878 = vunpack.c.l.b16 %v796
    %v879 = vunpack.c.l.b16 %v797
    %v880 = vunpack.c.l.b16 %v798
    %v881 = vunpack.c.l.b16 %v799
    %v882 = vunpack.c.l.b16 %v800
    %v883 = vunpack.c.l.b16 %v801
    %v884 = vunpack.c.l.b16 %v802
    %v885 = vunpack.c.l.b16 %v803
    %v886 = vunpack.c.l.b16 %v804
    %v887 = vunpack.c.l.b16 %v805
    %v888 = vunpack.c.l.b16 %v806
    %v889 = vunpack.c.l.b16 %v807
    %v890 = vunpack.c.l.b16 %v808
    %v891 = vunpack.c.l.b16 %v809
    %v892 = vunpack.c.l.b16 %v810
    %v893 = vunpack.c.l.b16 %v811
    %v894 = vunpack.c.l.b16 %v812
    %v895 = vunpack.c.l.b16 %v813
    %v896 = vunpack.c.l.b16 %v814
    %v897 = vunpack.c.l.b16 %v815
    %v898 = vunpack.c.l.b16 %v816
    %v899 = vunpack.c.l.b16 %v817
    %v900 = vunpack.c.l.b16 %v818
    %v901 = vunpack.c.l.b16 %v819
    %v902 = vpack.c.b16 %v867, %v866
    %v903 = vpack.c.b16 %v869, %v868
    %v904 = vpack.c.b16 %v871, %v870
    %v905 = vpack.c.b16 %v873, %v872
    %v906 = vpack.c.b16 %v875, %v874
    %v907 = vpack.c.b16 %v877, %v876
    %v908 = vpack.c.b16 %v879, %v878
    %v909 = vpack.c.b16 %v881, %v880
    %v910 = vpack.c.b16 %v883, %v882
    %v911 = vpack.c.b16 %v885, %v884
    %v912 = vpack.c.b16 %v887, %v886
    %v913 = vpack.c.b16 %v889, %v888
    %v914 = vpack.c.b16 %v891, %v890
    %v915 = vpack.c.b16 %v893, %v892
    %v916 = vpack.c.b16 %v895, %v894
    %v917 = vpack.c.b16 %v897, %v896
    %v918 = vpack.c.b16 %v899, %v898
    %v919 = vpack.c.b16 %v901, %v900
    %vm938 = vcmask 261120
    %v940 = vsel %vm938, %v822, 0
    %v943 = vsel %vm938, %v825, 0
    %v946 = vsel %vm938, %v828, 0
    %948 = vmatprep.subr.bf16.mxu0 0
    %949 = vmatpush1.bf16.msra.mxu0 %v902
    %950 = vmatprep.subr.bf16.mxu0 0
    %951 = vmatpush1.bf16.msra.mxu0 %v903
    %952 = vmatprep.subr.bf16.mxu0 0
    %953 = vmatpush1.bf16.msra.mxu0 %v904
    %954 = vmatprep.subr.bf16.mxu0 0
    %955 = vmatpush1.bf16.msra.mxu0 %v905
    %956 = vmatprep.subr.bf16.mxu0 0
    %957 = vmatpush1.bf16.msra.mxu0 %v906
    %958 = vmatprep.subr.bf16.mxu0 0
    %959 = vmatpush1.bf16.msra.mxu0 %v907
    %960 = vmatprep.subr.bf16.mxu0 0
    %961 = vmatpush1.bf16.msra.mxu0 %v908
    %962 = vmatprep.subr.bf16.mxu0 0
    %963 = vmatpush1.bf16.msra.mxu0 %v909
    %964 = vmatprep.subr.bf16.mxu0 0
    %965 = vmatpush1.bf16.msra.mxu0 %v910
    %966 = vmatprep.subr.bf16.mxu0 0
    %967 = vmatpush1.bf16.msra.mxu0 %v911
    %968 = vmatprep.subr.bf16.mxu0 0
    %969 = vmatpush1.bf16.msra.mxu0 %v912
    %970 = vmatprep.subr.bf16.mxu0 0
    %971 = vmatpush1.bf16.msra.mxu0 %v913
    %972 = vmatprep.subr.bf16.mxu0 0
    %973 = vmatpush1.bf16.msra.mxu0 %v914
    %974 = vmatprep.subr.bf16.mxu0 0
    %975 = vmatpush1.bf16.msra.mxu0 %v915
    %976 = vmatprep.subr.bf16.mxu0 0
    %977 = vmatpush1.bf16.msra.mxu0 %v916
    %978 = vmatprep.subr.bf16.mxu0 0
    %979 = vmatpush1.bf16.msra.mxu0 %v917
    %980 = vmatprep.mubr.bf16.mxu0 %v821
    %981 = vmatmul.mubr.bf16.gmra.mrb[0].mxu0 %v820
    %v982 = vpop.f32.mrb[0].mxu0
    %v983 = vadd.f32 %v829, %v982
    %v984 = vpop.f32.mrb[0].mxu0
    %v985 = vpop.f32.mrb[0].mxu0
    %v986 = vadd.f32 %v829, %v985
    %v987 = vpop.f32.mrb[0].mxu0
    %988 = vmatprep.mubr.bf16.mxu0 %v824
    %989 = vmatmul.mubr.bf16.gmra.mrb[0].mxu0 %v823
    %v990 = vpop.f32.mrb[0].mxu0
    %v991 = vadd.f32 %v829, %v990
    %v992 = vpop.f32.mrb[0].mxu0
    %v993 = vpop.f32.mrb[0].mxu0
    %v994 = vadd.f32 %v829, %v993
    %v995 = vpop.f32.mrb[0].mxu0
    %996 = vmatprep.mubr.bf16.mxu0 %v827
    %997 = vmatmul.mubr.bf16.gmra.mrb[0].mxu0 %v826
    %v998 = vpop.f32.mrb[0].mxu0
    %v999 = vadd.f32 %v829, %v998
    %v1000 = vpop.f32.mrb[0].mxu0
    %v1001 = vpop.f32.mrb[0].mxu0
    %v1002 = vadd.f32 %v829, %v1001
    %v1003 = vpop.f32.mrb[0].mxu0
    %1004 = vdwg.mxu0
    %1005 = vmatprep.subr.bf16.mxu0 0
    %1006 = vmatpush1.bf16.msra.mxu0 %v918
    %1007 = vmatprep.subr.bf16.mxu0 0
    %1008 = vmatpush1.bf16.msra.mxu0 %v919
    %1009 = vmatprep.subr.bf16.mxu0 0
    %1010 = vmatpush1.bf16.msra.mxu0 0
    %1011 = vmatprep.subr.bf16.mxu0 0
    %1012 = vmatpush1.bf16.msra.mxu0 0
    %1013 = vmatprep.subr.bf16.mxu0 0
    %1014 = vmatpush1.bf16.msra.mxu0 0
    %1015 = vmatprep.subr.bf16.mxu0 0
    %1016 = vmatpush1.bf16.msra.mxu0 0
    %1017 = vmatprep.subr.bf16.mxu0 0
    %1018 = vmatpush1.bf16.msra.mxu0 0
    %1019 = vmatprep.subr.bf16.mxu0 0
    %1020 = vmatpush1.bf16.msra.mxu0 0
    %1021 = vmatprep.subr.bf16.mxu0 0
    %1022 = vmatpush1.bf16.msra.mxu0 0
    %1023 = vmatprep.subr.bf16.mxu0 0
    %1024 = vmatpush1.bf16.msra.mxu0 0
    %1025 = vmatprep.subr.bf16.mxu0 0
    %1026 = vmatpush1.bf16.msra.mxu0 0
    %1027 = vmatprep.subr.bf16.mxu0 0
    %1028 = vmatpush1.bf16.msra.mxu0 0
    %1029 = vmatprep.subr.bf16.mxu0 0
    %1030 = vmatpush1.bf16.msra.mxu0 0
    %1031 = vmatprep.subr.bf16.mxu0 0
    %1032 = vmatpush1.bf16.msra.mxu0 0
    %1033 = vmatprep.subr.bf16.mxu0 0
    %1034 = vmatpush1.bf16.msra.mxu0 0
    %1035 = vmatprep.subr.bf16.mxu0 0
    %1036 = vmatpush1.bf16.msra.mxu0 0
    %1037 = vmatprep.mubr.bf16.mxu0 0
    %1038 = vmatmul.mubr.bf16.gmra.mrb[0].mxu0 %v940
    %v1039 = vpop.f32.mrb[0].mxu0
    %v1040 = vadd.f32 %v983, %v1039
    %v1041 = vpop.f32.mrb[0].mxu0
    %v1042 = vpop.f32.mrb[0].mxu0
    %v1043 = vadd.f32 %v986, %v1042
    %v1044 = vpop.f32.mrb[0].mxu0
    %1045 = vmatprep.mubr.bf16.mxu0 0
    %1046 = vmatmul.mubr.bf16.gmra.mrb[0].mxu0 %v943
    %v1047 = vpop.f32.mrb[0].mxu0
    %v1048 = vadd.f32 %v991, %v1047
    %v1049 = vpop.f32.mrb[0].mxu0
    %v1050 = vpop.f32.mrb[0].mxu0
    %v1051 = vadd.f32 %v994, %v1050
    %v1052 = vpop.f32.mrb[0].mxu0
    %1053 = vmatprep.mubr.bf16.mxu0 0
    %1054 = vmatmul.mubr.bf16.gmra.mrb[0].mxu0 %v946
    %v1055 = vpop.f32.mrb[0].mxu0
    %v1056 = vadd.f32 %v999, %v1055
    %v1057 = vpop.f32.mrb[0].mxu0
    %v1058 = vpop.f32.mrb[0].mxu0
    %v1059 = vadd.f32 %v1002, %v1058
    %v1060 = vpop.f32.mrb[0].mxu0
    %1061 = vdwg.mxu0
    %v1062 = vmax.f32 %v1040, 0.0
    %v1063 = vmax.f32 %v1043, 0.0
    %v1064 = vmax.f32 %v1048, 0.0
    %v1065 = vmax.f32 %v1051, 0.0
    %v1066 = vmax.f32 %v1056, 0.0
    %v1067 = vmax.f32 %v1059, 0.0
    %v1068 = vld [vmem:[%s3 + $0x90] sm:$0xf]
    %v1069 = vld [vmem:[%s3 + $0x94] sm:$0xf]
    %v1070 = vld [vmem:[%s3 + $0x98] sm:$0xf]
    %v1071 = vld [vmem:[%s3 + $0x9c] sm:$0xf]
    %v1072 = vpack.c.bf16 %v1062, %v1062
    %v1073 = vld [vmem:[%s3 + $0xa0] sm:$0xf]
    %v1074 = vld [vmem:[%s3 + $0xa4] sm:$0xf]
    %v1075 = vld [vmem:[%s3 + $0xa8] sm:$0xf]
    %v1076 = vld [vmem:[%s3 + $0xac] sm:$0xf]
    %v1077 = vpack.c.bf16 %v1063, %v1063
    %v1082 = vunpack.c.l.b16 %v1073
    %v1083 = vunpack.c.l.b16 %v1074
    %v1084 = vunpack.c.l.b16 %v1075
    %v1085 = vunpack.c.l.b16 %v1076
    %v1086 = vpack.c.b16 %v1083, %v1082
    %v1087 = vpack.c.b16 %v1085, %v1084
    %v1091 = vsel %vm938, %v1077, 0
    %1093 = vmatprep.subr.bf16.mxu0 0
    %1094 = vmatpush1.bf16.msra.mxu0 %v1086
    %1095 = vmatprep.subr.bf16.mxu0 0
    %1096 = vmatpush1.bf16.msra.mxu0 %v1087
    %1097 = vmatprep.subr.bf16.mxu0 0
    %1098 = vmatpush1.bf16.msra.mxu0 0
    %1099 = vmatprep.subr.bf16.mxu0 0
    %1100 = vmatpush1.bf16.msra.mxu0 0
    %1101 = vmatprep.subr.bf16.mxu0 0
    %1102 = vmatpush1.bf16.msra.mxu0 0
    %1103 = vmatprep.subr.bf16.mxu0 0
    %1104 = vmatpush1.bf16.msra.mxu0 0
    %1105 = vmatprep.subr.bf16.mxu0 0
    %1106 = vmatpush1.bf16.msra.mxu0 0
    %1107 = vmatprep.subr.bf16.mxu0 0
    %1108 = vmatpush1.bf16.msra.mxu0 0
    %1109 = vmatprep.subr.bf16.mxu0 0
    %1110 = vmatpush1.bf16.msra.mxu0 0
    %1111 = vmatprep.subr.bf16.mxu0 0
    %1112 = vmatpush1.bf16.msra.mxu0 0
    %1113 = vmatprep.subr.bf16.mxu0 0
    %1114 = vmatpush1.bf16.msra.mxu0 0
    %1115 = vmatprep.subr.bf16.mxu0 0
    %1116 = vmatpush1.bf16.msra.mxu0 0
    %1117 = vmatprep.subr.bf16.mxu0 0
    %1118 = vmatpush1.bf16.msra.mxu0 0
    %1119 = vmatprep.subr.bf16.mxu0 0
    %1120 = vmatpush1.bf16.msra.mxu0 0
    %1121 = vmatprep.subr.bf16.mxu0 0
    %1122 = vmatpush1.bf16.msra.mxu0 0
    %1123 = vmatprep.subr.bf16.mxu0 0
    %1124 = vmatpush1.bf16.msra.mxu0 0
    %1125 = vmatprep.mubr.bf16.mxu0 0
    %1126 = vmatmul.mubr.bf16.gmra.mrb[0].mxu0 %v1091
    %v1127 = vpop.f32.mrb[0].mxu0
    %v1128 = vadd.f32 0.0, %v1127
    %v1129 = vpop.f32.mrb[0].mxu0
    %v1130 = vpop.f32.mrb[0].mxu0
    %v1131 = vpop.f32.mrb[0].mxu0
    %1132 = vdwg.mxu0
    %v1137 = vunpack.c.l.b16 %v1068
    %v1138 = vunpack.c.l.b16 %v1069
    %v1139 = vunpack.c.l.b16 %v1070
    %v1140 = vunpack.c.l.b16 %v1071
    %v1141 = vpack.c.b16 %v1138, %v1137
    %v1142 = vpack.c.b16 %v1140, %v1139
    %v1146 = vsel %vm938, %v1072, 0
    %1148 = vmatprep.subr.bf16.mxu0 0
    %1149 = vmatpush1.bf16.msra.mxu0 %v1141
    %1150 = vmatprep.subr.bf16.mxu0 0
    %1151 = vmatpush1.bf16.msra.mxu0 %v1142
    %1152 = vmatprep.subr.bf16.mxu0 0
    %1153 = vmatpush1.bf16.msra.mxu0 0
    %1154 = vmatprep.subr.bf16.mxu0 0
    %1155 = vmatpush1.bf16.msra.mxu0 0
    %1156 = vmatprep.subr.bf16.mxu0 0
    %1157 = vmatpush1.bf16.msra.mxu0 0
    %1158 = vmatprep.subr.bf16.mxu0 0
    %1159 = vmatpush1.bf16.msra.mxu0 0
    %1160 = vmatprep.subr.bf16.mxu0 0
    %1161 = vmatpush1.bf16.msra.mxu0 0
    %1162 = vmatprep.subr.bf16.mxu0 0
    %1163 = vmatpush1.bf16.msra.mxu0 0
    %1164 = vmatprep.subr.bf16.mxu0 0
    %1165 = vmatpush1.bf16.msra.mxu0 0
    %1166 = vmatprep.subr.bf16.mxu0 0
    %1167 = vmatpush1.bf16.msra.mxu0 0
    %1168 = vmatprep.subr.bf16.mxu0 0
    %1169 = vmatpush1.bf16.msra.mxu0 0
    %1170 = vmatprep.subr.bf16.mxu0 0
    %1171 = vmatpush1.bf16.msra.mxu0 0
    %1172 = vmatprep.subr.bf16.mxu0 0
    %1173 = vmatpush1.bf16.msra.mxu0 0
    %1174 = vmatprep.subr.bf16.mxu0 0
    %1175 = vmatpush1.bf16.msra.mxu0 0
    %1176 = vmatprep.subr.bf16.mxu0 0
    %1177 = vmatpush1.bf16.msra.mxu0 0
    %1178 = vmatprep.subr.bf16.mxu0 0
    %1179 = vmatpush1.bf16.msra.mxu0 0
    %1180 = vmatprep.mubr.bf16.mxu0 0
    %1181 = vmatmul.mubr.bf16.gmra.mrb[0].mxu0 %v1146
    %v1182 = vpop.f32.mrb[0].mxu0
    %v1183 = vadd.f32 %v1128, %v1182
    %v1184 = vpop.f32.mrb[0].mxu0
    %v1185 = vpop.f32.mrb[0].mxu0
    %v1186 = vpop.f32.mrb[0].mxu0
    %1187 = vdwg.mxu0
    %v1188 = vld [vmem:[%s3 + $0xb0] sm:$0xf]
    %v1189 = vld [vmem:[%s3 + $0xb4] sm:$0xf]
    %v1190 = vld [vmem:[%s3 + $0xb8] sm:$0xf]
    %v1191 = vld [vmem:[%s3 + $0xbc] sm:$0xf]
    %v1192 = vpack.c.bf16 %v1064, %v1064
    %v1197 = vunpack.c.l.b16 %v1188
    %v1198 = vunpack.c.l.b16 %v1189
    %v1199 = vunpack.c.l.b16 %v1190
    %v1200 = vunpack.c.l.b16 %v1191
    %v1201 = vpack.c.b16 %v1198, %v1197
    %v1202 = vpack.c.b16 %v1200, %v1199
    %v1206 = vsel %vm938, %v1192, 0
    %1208 = vmatprep.subr.bf16.mxu0 0
    %1209 = vmatpush1.bf16.msra.mxu0 %v1201
    %1210 = vmatprep.subr.bf16.mxu0 0
    %1211 = vmatpush1.bf16.msra.mxu0 %v1202
    %1212 = vmatprep.subr.bf16.mxu0 0
    %1213 = vmatpush1.bf16.msra.mxu0 0
    %1214 = vmatprep.subr.bf16.mxu0 0
    %1215 = vmatpush1.bf16.msra.mxu0 0
    %1216 = vmatprep.subr.bf16.mxu0 0
    %1217 = vmatpush1.bf16.msra.mxu0 0
    %1218 = vmatprep.subr.bf16.mxu0 0
    %1219 = vmatpush1.bf16.msra.mxu0 0
    %1220 = vmatprep.subr.bf16.mxu0 0
    %1221 = vmatpush1.bf16.msra.mxu0 0
    %1222 = vmatprep.subr.bf16.mxu0 0
    %1223 = vmatpush1.bf16.msra.mxu0 0
    %1224 = vmatprep.subr.bf16.mxu0 0
    %1225 = vmatpush1.bf16.msra.mxu0 0
    %1226 = vmatprep.subr.bf16.mxu0 0
    %1227 = vmatpush1.bf16.msra.mxu0 0
    %1228 = vmatprep.subr.bf16.mxu0 0
    %1229 = vmatpush1.bf16.msra.mxu0 0
    %1230 = vmatprep.subr.bf16.mxu0 0
    %1231 = vmatpush1.bf16.msra.mxu0 0
    %1232 = vmatprep.subr.bf16.mxu0 0
    %1233 = vmatpush1.bf16.msra.mxu0 0
    %1234 = vmatprep.subr.bf16.mxu0 0
    %1235 = vmatpush1.bf16.msra.mxu0 0
    %1236 = vmatprep.subr.bf16.mxu0 0
    %1237 = vmatpush1.bf16.msra.mxu0 0
    %1238 = vmatprep.subr.bf16.mxu0 0
    %1239 = vmatpush1.bf16.msra.mxu0 0
    %1240 = vmatprep.mubr.bf16.mxu0 0
    %1241 = vmatmul.mubr.bf16.gmra.mrb[0].mxu0 %v1206
    %v1242 = vpop.f32.mrb[0].mxu0
    %v1243 = vadd.f32 0.0, %v1242
    %v1244 = vpop.f32.mrb[0].mxu0
    %v1245 = vpop.f32.mrb[0].mxu0
    %v1246 = vpop.f32.mrb[0].mxu0
    %1247 = vdwg.mxu0
    %v1248 = vadd.f32 %v1183, %v1243
    %v1249 = vld [vmem:[%s3 + $0xc0] sm:$0xf]
    %v1250 = vld [vmem:[%s3 + $0xc4] sm:$0xf]
    %v1251 = vld [vmem:[%s3 + $0xc8] sm:$0xf]
    %v1252 = vld [vmem:[%s3 + $0xcc] sm:$0xf]
    %v1253 = vpack.c.bf16 %v1065, %v1065
    %v1258 = vunpack.c.l.b16 %v1249
    %v1259 = vunpack.c.l.b16 %v1250
    %v1260 = vunpack.c.l.b16 %v1251
    %v1261 = vunpack.c.l.b16 %v1252
    %v1262 = vpack.c.b16 %v1259, %v1258
    %v1263 = vpack.c.b16 %v1261, %v1260
    %v1267 = vsel %vm938, %v1253, 0
    %1269 = vmatprep.subr.bf16.mxu0 0
    %1270 = vmatpush1.bf16.msra.mxu0 %v1262
    %1271 = vmatprep.subr.bf16.mxu0 0
    %1272 = vmatpush1.bf16.msra.mxu0 %v1263
    %1273 = vmatprep.subr.bf16.mxu0 0
    %1274 = vmatpush1.bf16.msra.mxu0 0
    %1275 = vmatprep.subr.bf16.mxu0 0
    %1276 = vmatpush1.bf16.msra.mxu0 0
    %1277 = vmatprep.subr.bf16.mxu0 0
    %1278 = vmatpush1.bf16.msra.mxu0 0
    %1279 = vmatprep.subr.bf16.mxu0 0
    %1280 = vmatpush1.bf16.msra.mxu0 0
    %1281 = vmatprep.subr.bf16.mxu0 0
    %1282 = vmatpush1.bf16.msra.mxu0 0
    %1283 = vmatprep.subr.bf16.mxu0 0
    %1284 = vmatpush1.bf16.msra.mxu0 0
    %1285 = vmatprep.subr.bf16.mxu0 0
    %1286 = vmatpush1.bf16.msra.mxu0 0
    %1287 = vmatprep.subr.bf16.mxu0 0
    %1288 = vmatpush1.bf16.msra.mxu0 0
    %1289 = vmatprep.subr.bf16.mxu0 0
    %1290 = vmatpush1.bf16.msra.mxu0 0
    %1291 = vmatprep.subr.bf16.mxu0 0
    %1292 = vmatpush1.bf16.msra.mxu0 0
    %1293 = vmatprep.subr.bf16.mxu0 0
    %1294 = vmatpush1.bf16.msra.mxu0 0
    %1295 = vmatprep.subr.bf16.mxu0 0
    %1296 = vmatpush1.bf16.msra.mxu0 0
    %1297 = vmatprep.subr.bf16.mxu0 0
    %1298 = vmatpush1.bf16.msra.mxu0 0
    %1299 = vmatprep.subr.bf16.mxu0 0
    %1300 = vmatpush1.bf16.msra.mxu0 0
    %1301 = vmatprep.mubr.bf16.mxu0 0
    %1302 = vmatmul.mubr.bf16.gmra.mrb[0].mxu0 %v1267
    %v1303 = vpop.f32.mrb[0].mxu0
    %v1304 = vadd.f32 0.0, %v1303
    %v1305 = vpop.f32.mrb[0].mxu0
    %v1306 = vpop.f32.mrb[0].mxu0
    %v1307 = vpop.f32.mrb[0].mxu0
    %1308 = vdwg.mxu0
    %v1309 = vadd.f32 %v1248, %v1304
    %v1310 = vld [vmem:[%s3 + $0xd0] sm:$0xf]
    %v1311 = vld [vmem:[%s3 + $0xd4] sm:$0xf]
    %v1312 = vld [vmem:[%s3 + $0xd8] sm:$0xf]
    %v1313 = vld [vmem:[%s3 + $0xdc] sm:$0xf]
    %v1314 = vpack.c.bf16 %v1066, %v1066
    %v1319 = vunpack.c.l.b16 %v1310
    %v1320 = vunpack.c.l.b16 %v1311
    %v1321 = vunpack.c.l.b16 %v1312
    %v1322 = vunpack.c.l.b16 %v1313
    %v1323 = vpack.c.b16 %v1320, %v1319
    %v1324 = vpack.c.b16 %v1322, %v1321
    %v1328 = vsel %vm938, %v1314, 0
    %1330 = vmatprep.subr.bf16.mxu0 0
    %1331 = vmatpush1.bf16.msra.mxu0 %v1323
    %1332 = vmatprep.subr.bf16.mxu0 0
    %1333 = vmatpush1.bf16.msra.mxu0 %v1324
    %1334 = vmatprep.subr.bf16.mxu0 0
    %1335 = vmatpush1.bf16.msra.mxu0 0
    %1336 = vmatprep.subr.bf16.mxu0 0
    %1337 = vmatpush1.bf16.msra.mxu0 0
    %1338 = vmatprep.subr.bf16.mxu0 0
    %1339 = vmatpush1.bf16.msra.mxu0 0
    %1340 = vmatprep.subr.bf16.mxu0 0
    %1341 = vmatpush1.bf16.msra.mxu0 0
    %1342 = vmatprep.subr.bf16.mxu0 0
    %1343 = vmatpush1.bf16.msra.mxu0 0
    %1344 = vmatprep.subr.bf16.mxu0 0
    %1345 = vmatpush1.bf16.msra.mxu0 0
    %1346 = vmatprep.subr.bf16.mxu0 0
    %1347 = vmatpush1.bf16.msra.mxu0 0
    %1348 = vmatprep.subr.bf16.mxu0 0
    %1349 = vmatpush1.bf16.msra.mxu0 0
    %1350 = vmatprep.subr.bf16.mxu0 0
    %1351 = vmatpush1.bf16.msra.mxu0 0
    %1352 = vmatprep.subr.bf16.mxu0 0
    %1353 = vmatpush1.bf16.msra.mxu0 0
    %1354 = vmatprep.subr.bf16.mxu0 0
    %1355 = vmatpush1.bf16.msra.mxu0 0
    %1356 = vmatprep.subr.bf16.mxu0 0
    %1357 = vmatpush1.bf16.msra.mxu0 0
    %1358 = vmatprep.subr.bf16.mxu0 0
    %1359 = vmatpush1.bf16.msra.mxu0 0
    %1360 = vmatprep.subr.bf16.mxu0 0
    %1361 = vmatpush1.bf16.msra.mxu0 0
    %1362 = vmatprep.mubr.bf16.mxu0 0
    %1363 = vmatmul.mubr.bf16.gmra.mrb[0].mxu0 %v1328
    %v1364 = vpop.f32.mrb[0].mxu0
    %v1365 = vadd.f32 0.0, %v1364
    %v1366 = vpop.f32.mrb[0].mxu0
    %v1367 = vpop.f32.mrb[0].mxu0
    %v1368 = vpop.f32.mrb[0].mxu0
    %1369 = vdwg.mxu0
    %v1370 = vadd.f32 %v1309, %v1365
    %v1371 = vld [vmem:[%s3 + $0xe0] sm:$0xf]
    %v1372 = vld [vmem:[%s3 + $0xe4] sm:$0xf]
    %v1373 = vld [vmem:[%s3 + $0xe8] sm:$0xf]
    %v1374 = vld [vmem:[%s3 + $0xec] sm:$0xf]
    %v1375 = vpack.c.bf16 %v1067, %v1067
    %v1380 = vunpack.c.l.b16 %v1371
    %v1381 = vunpack.c.l.b16 %v1372
    %v1382 = vunpack.c.l.b16 %v1373
    %v1383 = vunpack.c.l.b16 %v1374
    %v1384 = vpack.c.b16 %v1381, %v1380
    %v1385 = vpack.c.b16 %v1383, %v1382
    %v1389 = vsel %vm938, %v1375, 0
    %1391 = vmatprep.subr.bf16.mxu0 0
    %1392 = vmatpush1.bf16.msra.mxu0 %v1384
    %1393 = vmatprep.subr.bf16.mxu0 0
    %1394 = vmatpush1.bf16.msra.mxu0 %v1385
    %1395 = vmatprep.subr.bf16.mxu0 0
    %1396 = vmatpush1.bf16.msra.mxu0 0
    %1397 = vmatprep.subr.bf16.mxu0 0
    %1398 = vmatpush1.bf16.msra.mxu0 0
    %1399 = vmatprep.subr.bf16.mxu0 0
    %1400 = vmatpush1.bf16.msra.mxu0 0
    %1401 = vmatprep.subr.bf16.mxu0 0
    %1402 = vmatpush1.bf16.msra.mxu0 0
    %1403 = vmatprep.subr.bf16.mxu0 0
    %1404 = vmatpush1.bf16.msra.mxu0 0
    %1405 = vmatprep.subr.bf16.mxu0 0
    %1406 = vmatpush1.bf16.msra.mxu0 0
    %1407 = vmatprep.subr.bf16.mxu0 0
    %1408 = vmatpush1.bf16.msra.mxu0 0
    %1409 = vmatprep.subr.bf16.mxu0 0
    %1410 = vmatpush1.bf16.msra.mxu0 0
    %1411 = vmatprep.subr.bf16.mxu0 0
    %1412 = vmatpush1.bf16.msra.mxu0 0
    %1413 = vmatprep.subr.bf16.mxu0 0
    %1414 = vmatpush1.bf16.msra.mxu0 0
    %1415 = vmatprep.subr.bf16.mxu0 0
    %1416 = vmatpush1.bf16.msra.mxu0 0
    %1417 = vmatprep.subr.bf16.mxu0 0
    %1418 = vmatpush1.bf16.msra.mxu0 0
    %1419 = vmatprep.subr.bf16.mxu0 0
    %1420 = vmatpush1.bf16.msra.mxu0 0
    %1421 = vmatprep.subr.bf16.mxu0 0
    %1422 = vmatpush1.bf16.msra.mxu0 0
    %1423 = vmatprep.mubr.bf16.mxu0 0
    %1424 = vmatmul.mubr.bf16.gmra.mrb[0].mxu0 %v1389
    %v1425 = vpop.f32.mrb[0].mxu0
    %v1426 = vadd.f32 0.0, %v1425
    %v1427 = vpop.f32.mrb[0].mxu0
    %v1428 = vpop.f32.mrb[0].mxu0
    %v1429 = vpop.f32.mrb[0].mxu0
    %1430 = vdwg.mxu0
    %v1431 = vadd.f32 %v1370, %v1426
    %v1432 = vld [vmem:[%s4 + $0x2] ss:$0 sm:$0xff]
    %v1433 = vadd.f32 %v1431, %v1432
    %v1434 = vmax.f32 %v1433, 0.0
    %v1435 = vld [vmem:[%s3 + $0xf0] sm:$0xf]
    %v1436 = vld [vmem:[%s3 + $0xf4] sm:$0xf]
    %v1437 = vld [vmem:[%s3 + $0xf8] sm:$0xf]
    %v1438 = vld [vmem:[%s3 + $0xfc] sm:$0xf]
    %v1439 = vld [vmem:[%s3 + $0x100] sm:$0xf]
    %v1440 = vld [vmem:[%s3 + $0x104] sm:$0xf]
    %v1441 = vpack.c.bf16 %v1434, %v1434
    %v1442 = vld [vmem:[%s1] sm:$0xf]
    %v1445 = vunpack.c.l.b16 %v1439
    %v1446 = vunpack.c.l.b16 %v1440
    %v1447 = vpack.c.b16 %v1446, %v1445
    %vm1449 = vcmask 130048
    %v1451 = vsel %vm1449, %v1442, 0
    %1453 = vmatprep.subr.bf16.mxu0 0
    %1454 = vmatpush1.bf16.msra.mxu0 %v1447
    %1455 = vmatprep.subr.bf16.mxu0 0
    %1456 = vmatpush1.bf16.msra.mxu0 0
    %1457 = vmatprep.subr.bf16.mxu0 0
    %1458 = vmatpush1.bf16.msra.mxu0 0
    %1459 = vmatprep.subr.bf16.mxu0 0
    %1460 = vmatpush1.bf16.msra.mxu0 0
    %1461 = vmatprep.subr.bf16.mxu0 0
    %1462 = vmatpush1.bf16.msra.mxu0 0
    %1463 = vmatprep.subr.bf16.mxu0 0
    %1464 = vmatpush1.bf16.msra.mxu0 0
    %1465 = vmatprep.subr.bf16.mxu0 0
    %1466 = vmatpush1.bf16.msra.mxu0 0
    %1467 = vmatprep.subr.bf16.mxu0 0
    %1468 = vmatpush1.bf16.msra.mxu0 0
    %1469 = vmatprep.subr.bf16.mxu0 0
    %1470 = vmatpush1.bf16.msra.mxu0 0
    %1471 = vmatprep.subr.bf16.mxu0 0
    %1472 = vmatpush1.bf16.msra.mxu0 0
    %1473 = vmatprep.subr.bf16.mxu0 0
    %1474 = vmatpush1.bf16.msra.mxu0 0
    %1475 = vmatprep.subr.bf16.mxu0 0
    %1476 = vmatpush1.bf16.msra.mxu0 0
    %1477 = vmatprep.subr.bf16.mxu0 0
    %1478 = vmatpush1.bf16.msra.mxu0 0
    %1479 = vmatprep.subr.bf16.mxu0 0
    %1480 = vmatpush1.bf16.msra.mxu0 0
    %1481 = vmatprep.subr.bf16.mxu0 0
    %1482 = vmatpush1.bf16.msra.mxu0 0
    %1483 = vmatprep.subr.bf16.mxu0 0
    %1484 = vmatpush1.bf16.msra.mxu0 0
    %1485 = vmatprep.mubr.bf16.mxu0 0
    %1486 = vmatmul.mubr.bf16.gmra.mrb[0].mxu0 %v1451
    %v1487 = vpop.f32.mrb[0].mxu0
    %v1488 = vadd.f32 0.0, %v1487
    %v1489 = vpop.f32.mrb[0].mxu0
    %v1490 = vpop.f32.mrb[0].mxu0
    %v1491 = vpop.f32.mrb[0].mxu0
    %1492 = vdwg.mxu0
    %v1497 = vunpack.c.l.b16 %v1435
    %v1498 = vunpack.c.l.b16 %v1436
    %v1499 = vunpack.c.l.b16 %v1437
    %v1500 = vunpack.c.l.b16 %v1438
    %v1501 = vpack.c.b16 %v1498, %v1497
    %v1502 = vpack.c.b16 %v1500, %v1499
    %v1506 = vsel %vm938, %v1441, 0
    %1508 = vmatprep.subr.bf16.mxu0 0
    %1509 = vmatpush1.bf16.msra.mxu0 %v1501
    %1510 = vmatprep.subr.bf16.mxu0 0
    %1511 = vmatpush1.bf16.msra.mxu0 %v1502
    %1512 = vmatprep.subr.bf16.mxu0 0
    %1513 = vmatpush1.bf16.msra.mxu0 0
    %1514 = vmatprep.subr.bf16.mxu0 0
    %1515 = vmatpush1.bf16.msra.mxu0 0
    %1516 = vmatprep.subr.bf16.mxu0 0
    %1517 = vmatpush1.bf16.msra.mxu0 0
    %1518 = vmatprep.subr.bf16.mxu0 0
    %1519 = vmatpush1.bf16.msra.mxu0 0
    %1520 = vmatprep.subr.bf16.mxu0 0
    %1521 = vmatpush1.bf16.msra.mxu0 0
    %1522 = vmatprep.subr.bf16.mxu0 0
    %1523 = vmatpush1.bf16.msra.mxu0 0
    %1524 = vmatprep.subr.bf16.mxu0 0
    %1525 = vmatpush1.bf16.msra.mxu0 0
    %1526 = vmatprep.subr.bf16.mxu0 0
    %1527 = vmatpush1.bf16.msra.mxu0 0
    %1528 = vmatprep.subr.bf16.mxu0 0
    %1529 = vmatpush1.bf16.msra.mxu0 0
    %1530 = vmatprep.subr.bf16.mxu0 0
    %1531 = vmatpush1.bf16.msra.mxu0 0
    %1532 = vmatprep.subr.bf16.mxu0 0
    %1533 = vmatpush1.bf16.msra.mxu0 0
    %1534 = vmatprep.subr.bf16.mxu0 0
    %1535 = vmatpush1.bf16.msra.mxu0 0
    %1536 = vmatprep.subr.bf16.mxu0 0
    %1537 = vmatpush1.bf16.msra.mxu0 0
    %1538 = vmatprep.subr.bf16.mxu0 0
    %1539 = vmatpush1.bf16.msra.mxu0 0
    %1540 = vmatprep.mubr.bf16.mxu0 0
    %1541 = vmatmul.mubr.bf16.gmra.mrb[0].mxu0 %v1506
    %v1542 = vpop.f32.mrb[0].mxu0
    %v1543 = vadd.f32 %v1488, %v1542
    %v1544 = vpop.f32.mrb[0].mxu0
    %v1545 = vpop.f32.mrb[0].mxu0
    %v1546 = vpop.f32.mrb[0].mxu0
    %1547 = vdwg.mxu0
    %v1548 = vld [vmem:[%s4 + $0x3] ss:$0 sm:$0xff]
    %v1549 = vadd.f32 %v1543, %v1548
    %v1550 = vmax.f32 %v1549, 0.0
    %v1551 = vld [vmem:[%s3 + $0x108] sm:$0xf]
    %v1552 = vld [vmem:[%s3 + $0x10c] sm:$0xf]
    %v1553 = vld [vmem:[%s3 + $0x110] sm:$0xf]
    %v1554 = vld [vmem:[%s3 + $0x114] sm:$0xf]
    %v1555 = vpack.c.bf16 %v1550, %v1550
    %v1556 = vld [vmem:[%s4 + $0x4] ss:$0 sm:$0xff]
    %v1561 = vunpack.c.l.b16 %v1551
    %v1562 = vunpack.c.l.b16 %v1552
    %v1563 = vunpack.c.l.b16 %v1553
    %v1564 = vunpack.c.l.b16 %v1554
    %v1565 = vpack.c.b16 %v1562, %v1561
    %v1566 = vpack.c.b16 %v1564, %v1563
    %v1570 = vsel %vm938, %v1555, 0
    %1572 = vmatprep.subr.bf16.mxu0 0
    %1573 = vmatpush1.bf16.msra.mxu0 %v1565
    %1574 = vmatprep.subr.bf16.mxu0 0
    %1575 = vmatpush1.bf16.msra.mxu0 %v1566
    %1576 = vmatprep.subr.bf16.mxu0 0
    %1577 = vmatpush1.bf16.msra.mxu0 0
    %1578 = vmatprep.subr.bf16.mxu0 0
    %1579 = vmatpush1.bf16.msra.mxu0 0
    %1580 = vmatprep.subr.bf16.mxu0 0
    %1581 = vmatpush1.bf16.msra.mxu0 0
    %1582 = vmatprep.subr.bf16.mxu0 0
    %1583 = vmatpush1.bf16.msra.mxu0 0
    %1584 = vmatprep.subr.bf16.mxu0 0
    %1585 = vmatpush1.bf16.msra.mxu0 0
    %1586 = vmatprep.subr.bf16.mxu0 0
    %1587 = vmatpush1.bf16.msra.mxu0 0
    %1588 = vmatprep.subr.bf16.mxu0 0
    %1589 = vmatpush1.bf16.msra.mxu0 0
    %1590 = vmatprep.subr.bf16.mxu0 0
    %1591 = vmatpush1.bf16.msra.mxu0 0
    %1592 = vmatprep.subr.bf16.mxu0 0
    %1593 = vmatpush1.bf16.msra.mxu0 0
    %1594 = vmatprep.subr.bf16.mxu0 0
    %1595 = vmatpush1.bf16.msra.mxu0 0
    %1596 = vmatprep.subr.bf16.mxu0 0
    %1597 = vmatpush1.bf16.msra.mxu0 0
    %1598 = vmatprep.subr.bf16.mxu0 0
    %1599 = vmatpush1.bf16.msra.mxu0 0
    %1600 = vmatprep.subr.bf16.mxu0 0
    %1601 = vmatpush1.bf16.msra.mxu0 0
    %1602 = vmatprep.subr.bf16.mxu0 0
    %1603 = vmatpush1.bf16.msra.mxu0 0
    %1604 = vmatprep.mubr.bf16.mxu0 0
    %1605 = vmatmul.mubr.bf16.gmra.mrb[0].mxu0 %v1570
    %v1606 = vpop.f32.mrb[0].mxu0
    %v1607 = vadd.f32 %v1556, %v1606
    %v1608 = vpop.f32.mrb[0].mxu0
    %v1609 = vpop.f32.mrb[0].mxu0
    %v1610 = vpop.f32.mrb[0].mxu0
    %1611 = vdwg.mxu0
    %1612 = vst.msk [vmem:[#allocation2] sm:$0xff] %vm938, %v1607
    // Predicated region
    $region22: #{convnet_mlp_forward.1} parent=1 // pred_check
      _
    $region23: #{convnet_mlp_forward.1} parent=1 // pred_check_branch
      %1614 = sbr.rel (0) target = $region25
    $region24: #{convnet_mlp_forward.1} parent=1 // pred_region
      %s1616 = ssub.s32 128, 128
      %1617 = vsyncadd [#allocation3], %s1616
      %s1619 = sshll.u32 [#allocation2], 4
      %s1620 = int_to_ptr.vmem [resolvable:$true] %s1619
      %1622 = dma.vmem_to_hbm [thread:$0]  %s1620, 128, %s5, [#allocation3]
    $region25: #{convnet_mlp_forward.1} parent=1 // pred_fallthru
      _
    // Predicated region
    $region26: #{convnet_mlp_forward.1} parent=1 // pred_check
      _
    $region27: #{convnet_mlp_forward.1} parent=1 // pred_check_branch
      %1624 = sbr.rel (0) target = $region29
    $region28: #{convnet_mlp_forward.1} parent=1 // pred_region
      %1625 = dma.done [#allocation3], 128
    $region29: #{convnet_mlp_forward.1} parent=1 // pred_fallthru
      _
    %1626 = vsyncpa [#allocation3], 1

</llo_original>
